<compile_context>
chip_gen: v5e
topology: v5e:2x2
jax: 0.10.0
libtpu: 0.0.40
codegen_flags: <defaults>
</compile_context>

<pallas_src>
import functools

import jax
import jax.numpy as jnp
import numpy as np
from jax.experimental import pallas as pl
from jax.experimental.pallas import tpu as pltpu

N_EMBED = 64
NUM_HEADS = 6
HEAD_SIZE = N_EMBED // NUM_HEADS  # 10, as in Block(n_embed, n_head)


def _multihead_kernel(x_ref, mask_ref, wq_ref, wk_ref, wv_ref, wp_ref, bp_ref,
                      o_ref, *, num_heads, head_size, mxu_dtype):
    # x_ref   : (Bb, T, C)
    # mask_ref: (T, T) f32 additive causal mask (0 where allowed, -inf where masked)
    # wq/wk/wv_ref : (C, H*hs)   (Wq pre-scaled by C**-0.5 on the host)
    # wp_ref  : (H, hs, C)       (projection weight, per-head slices)
    # bp_ref  : (1, C)
    # o_ref   : (Bb, T, C)
    H, hs = num_heads, head_size
    Bb, T, C = x_ref.shape

    x = x_ref[...].astype(mxu_dtype)            # (Bb, T, C)
    mask = mask_ref[...]                        # (T, T), f32

    # ---- fused QKV projections: 3 wide matmuls instead of 3*H tiny ones ----
    wq = wq_ref[...].astype(mxu_dtype)          # (C, H*hs), already holds the C**-0.5 scale
    wk = wk_ref[...].astype(mxu_dtype)
    wv = wv_ref[...].astype(mxu_dtype)
    q_all = jnp.einsum('btc,cf->btf', x, wq, preferred_element_type=jnp.float32)
    k_all = jnp.einsum('btc,cf->btf', x, wk, preferred_element_type=jnp.float32)
    v_all = jnp.einsum('btc,cf->btf', x, wv, preferred_element_type=jnp.float32)

    # ---- per-head attention, accumulating the output projection on the fly ----
    acc = jnp.zeros((Bb, T, C), jnp.float32)
    for h in range(H):                          # H is small: static unroll
        lo = h * hs
        q = q_all[:, :, lo:lo + hs]             # (Bb, T, hs)
        k = k_all[:, :, lo:lo + hs]
        v = v_all[:, :, lo:lo + hs]

        # scores already include the C**-0.5 scale (folded into Wq)
        s = jnp.einsum('btd,bud->btu', q, k,
                       preferred_element_type=jnp.float32)          # (Bb, T, T)
        s = s + mask[None]                                          # causal mask (additive)

        # softmax along the last dim (f32; exp + approx reciprocal live on the EUP)
        s = s - jnp.max(s, axis=-1, keepdims=True)
        p = jnp.exp(s)
        p = p * pl.reciprocal(jnp.sum(p, axis=-1, keepdims=True), approx=True)

        ho = jnp.einsum('btu,bud->btd', p.astype(mxu_dtype), v.astype(mxu_dtype),
                        preferred_element_type=jnp.float32)          # (Bb, T, hs)

        # per-head output projection accumulation: replaces concat + (T,H*hs)@(H*hs,C)
        acc = acc + jnp.einsum('btd,dc->btc', ho.astype(mxu_dtype),
                               wp_ref[h].astype(mxu_dtype),
                               preferred_element_type=jnp.float32)   # (Bb, T, C)

    o_ref[...] = (acc + bp_ref[...]).astype(o_ref.dtype)


def multihead_forward(x, wq, wk, wv, wp, bp, *, block_b=None, mxu_dtype=jnp.float32):
    """x: (B,T,C); wq/wk/wv: (H,C,hs); wp: (H*hs,C); bp: (C,).

    block_b : batch rows processed per grid step (None -> whole batch for small B).
    mxu_dtype: dtype fed to the MXU (use jnp.bfloat16 on v6e/v7x for real sizes;
               accumulation / softmax stay f32).
    """
    B, T, C = x.shape
    H, _, hs = wq.shape

    # Amortize the ~0.35 us per-grid-step overhead: process multiple batch rows per step.
    # (For large B on v7x, keep >= 2 grid steps so both TensorCores stay busy.)
    if block_b is None:
        block_b = B if B <= 4 else next(d for d in (8, 4, 2, 1) if B % d == 0)
    assert B % block_b == 0, "block_b must divide B"

    scale = jnp.float32(C) ** -0.5   # n_embed**-0.5, exactly as the PyTorch code

    # Repack per-head weights into fused (C, H*hs) matrices; fold the score scale into Wq
    # so the kernel never multiplies the (T,T) scores.
    wq_f = (jnp.transpose(wq, (1, 0, 2)).reshape(C, H * hs) * scale).astype(x.dtype)
    wk_f = jnp.transpose(wk, (1, 0, 2)).reshape(C, H * hs).astype(x.dtype)
    wv_f = jnp.transpose(wv, (1, 0, 2)).reshape(C, H * hs).astype(x.dtype)
    wp_r = wp.reshape(H, hs, C)                 # per-head slices of the projection
    bp2 = bp.reshape(1, C)

    # Precomputed additive causal mask (0 where col <= row, -inf elsewhere), resident in VMEM.
    mask = jnp.where(jnp.tril(jnp.ones((T, T), dtype=bool)),
                     jnp.float32(0.0), -jnp.inf).astype(jnp.float32)

    kernel = functools.partial(_multihead_kernel, num_heads=H, head_size=hs,
                               mxu_dtype=mxu_dtype)

    # NOTE: output last dim C=64 is half a lane; stores are masked. A lane-dense output
    # ((B, T*C)) would help only if the surrounding model tolerates that layout.
    return pl.pallas_call(
        kernel,
        out_shape=jax.ShapeDtypeStruct((B, T, C), x.dtype),
        grid_spec=pltpu.PrefetchScalarGridSpec(
            num_scalar_prefetch=0,
            grid=(B // block_b,),
            in_specs=[
                pl.BlockSpec((block_b, T, C), lambda b: (b, 0, 0)),   # x: block of batch rows
                pl.BlockSpec((T, T), lambda b: (0, 0)),               # causal mask (resident)
                pl.BlockSpec((C, H * hs), lambda b: (0, 0)),          # fused Wq (pre-scaled)
                pl.BlockSpec((C, H * hs), lambda b: (0, 0)),          # fused Wk
                pl.BlockSpec((C, H * hs), lambda b: (0, 0)),          # fused Wv
                pl.BlockSpec((H, hs, C), lambda b: (0, 0, 0)),        # projection weight
                pl.BlockSpec((1, C), lambda b: (0, 0)),               # projection bias
            ],
            out_specs=pl.BlockSpec((block_b, T, C), lambda b: (b, 0, 0)),
        ),
        compiler_params=pltpu.CompilerParams(
            dimension_semantics=("parallel",)),
    )(x, mask, wq_f, wk_f, wv_f, wp_r, bp2)


def multihead_reference(x, wq, wk, wv, wp, bp):
    """Pure-JAX reference mirroring the PyTorch module."""
    B, T, C = x.shape
    scale = C ** -0.5
    mask = jnp.tril(jnp.ones((T, T), dtype=bool))
    q = jnp.einsum('btc,hcs->bhts', x, wq)
    k = jnp.einsum('btc,hcs->bhts', x, wk)
    v = jnp.einsum('btc,hcs->bhts', x, wv)
    w = jnp.einsum('bhts,bhus->bhtu', q, k) * scale
    w = jnp.where(mask[None, None], w, -jnp.inf)
    w = jax.nn.softmax(w, axis=-1)
    o = jnp.einsum('bhtu,bhus->bhts', w, v)                       # (B,H,T,hs)
    o = jnp.transpose(o, (0, 2, 1, 3)).reshape(B, T, -1)          # concat heads
    return o @ wp + bp


if __name__ == "__main__":
    B, T = 2, 8
    C, H, hs = N_EMBED, NUM_HEADS, HEAD_SIZE

    key = jax.random.PRNGKey(0)
    kx, kq, kk, kv, kp, kb = jax.random.split(key, 6)

    x = jax.random.normal(kx, (B, T, C), dtype=jnp.float32)
    # deterministic parameter init (synthetic; matches the nn.Linear shapes)
    bound_qkv = 1.0 / np.sqrt(C)
    wq = jax.random.uniform(kq, (H, C, hs), jnp.float32, -bound_qkv, bound_qkv)
    wk = jax.random.uniform(kk, (H, C, hs), jnp.float32, -bound_qkv, bound_qkv)
    wv = jax.random.uniform(kv, (H, C, hs), jnp.float32, -bound_qkv, bound_qkv)
    bound_p = 1.0 / np.sqrt(H * hs)
    wp = jax.random.uniform(kp, (H * hs, C), jnp.float32, -bound_p, bound_p)
    bp = jax.random.uniform(kb, (C,), jnp.float32, -bound_p, bound_p)

    out = multihead_forward(x, wq, wk, wv, wp, bp)
    out = jax.block_until_ready(out)

    ref = multihead_reference(x, wq, wk, wv, wp, bp)
    # Tolerance loosened slightly vs. exact because the softmax denominator uses the
    # hardware approximate reciprocal (EUP vrcp).
    np.testing.assert_allclose(np.asarray(out), np.asarray(ref), rtol=5e-3, atol=5e-3)

    print("KERNEL_OK")
</pallas_src>

<mosaic_0001>
module attributes {stable_mosaic.version = 11 : i64} {
  func.func @_multihead_kernel(%arg0: i32, %arg1: memref<2x8x64xf32, #tpu.memory_space<vmem>>, %arg2: memref<8x8xf32, #tpu.memory_space<vmem>>, %arg3: memref<64x60xf32, #tpu.memory_space<vmem>>, %arg4: memref<64x60xf32, #tpu.memory_space<vmem>>, %arg5: memref<64x60xf32, #tpu.memory_space<vmem>>, %arg6: memref<6x10x64xf32, #tpu.memory_space<vmem>>, %arg7: memref<1x64xf32, #tpu.memory_space<vmem>>, %arg8: memref<2x8x64xf32, #tpu.memory_space<vmem>>) attributes {dimension_semantics = [#tpu.dimension_semantics<parallel>], iteration_bounds = array<i64: 1>, scalar_prefetch = 0 : i64, scratch_operands = 0 : i64, tpu.core_type = #tpu.core_type<tc>, window_params = [{transform_indices = @transform_0, window_bounds = array<i64: 2, 8, 64>}, {pipeline_mode = #tpu.pipeline_mode<synchronous>, transform_indices = @transform_1, window_bounds = array<i64: 8, 8>}, {pipeline_mode = #tpu.pipeline_mode<synchronous>, transform_indices = @transform_2, window_bounds = array<i64: 64, 60>}, {pipeline_mode = #tpu.pipeline_mode<synchronous>, transform_indices = @transform_3, window_bounds = array<i64: 64, 60>}, {pipeline_mode = #tpu.pipeline_mode<synchronous>, transform_indices = @transform_4, window_bounds = array<i64: 64, 60>}, {pipeline_mode = #tpu.pipeline_mode<synchronous>, transform_indices = @transform_5, window_bounds = array<i64: 6, 10, 64>}, {pipeline_mode = #tpu.pipeline_mode<synchronous>, transform_indices = @transform_6, window_bounds = array<i64: 1, 64>}, {transform_indices = @transform_7, window_bounds = array<i64: 2, 8, 64>}]} {
    %c0 = arith.constant 0 : index
    %c0_0 = arith.constant 0 : index
    %c0_1 = arith.constant 0 : index
    %0 = vector.load %arg1[%c0, %c0_0, %c0_1] : memref<2x8x64xf32, #tpu.memory_space<vmem>>, vector<2x8x64xf32>
    %c0_2 = arith.constant 0 : index
    %c0_3 = arith.constant 0 : index
    %1 = vector.load %arg2[%c0_2, %c0_3] : memref<8x8xf32, #tpu.memory_space<vmem>>, vector<8x8xf32>
    %c0_4 = arith.constant 0 : index
    %c0_5 = arith.constant 0 : index
    %2 = vector.load %arg3[%c0_4, %c0_5] : memref<64x60xf32, #tpu.memory_space<vmem>>, vector<64x60xf32>
    %c0_6 = arith.constant 0 : index
    %c0_7 = arith.constant 0 : index
    %3 = vector.load %arg4[%c0_6, %c0_7] : memref<64x60xf32, #tpu.memory_space<vmem>>, vector<64x60xf32>
    %c0_8 = arith.constant 0 : index
    %c0_9 = arith.constant 0 : index
    %4 = vector.load %arg5[%c0_8, %c0_9] : memref<64x60xf32, #tpu.memory_space<vmem>>, vector<64x60xf32>
    "tpu.trace_start"() <{level = 10 : i32, message = "btc,cf->btf"}> : () -> ()
    %cst = arith.constant dense<0.000000e+00> : vector<2x8x60xf32>
    %5 = tpu.matmul %0, %2, %cst {dimension_numbers = #tpu.dot_dimension_numbers<[2], [0], [0, 1], [1], [0, 0, 0, 1, 1, 1], [], []>} : vector<2x8x64xf32>, vector<64x60xf32>, vector<2x8x60xf32> -> vector<2x8x60xf32>
    %cst_10 = arith.constant dense<0.000000e+00> : vector<2x8x60xf32>
    %6 = tpu.matmul %0, %3, %cst_10 {dimension_numbers = #tpu.dot_dimension_numbers<[2], [0], [0, 1], [1], [0, 0, 0, 1, 1, 1], [], []>} : vector<2x8x64xf32>, vector<64x60xf32>, vector<2x8x60xf32> -> vector<2x8x60xf32>
    %cst_11 = arith.constant dense<0.000000e+00> : vector<2x8x60xf32>
    %7 = tpu.matmul %0, %4, %cst_11 {dimension_numbers = #tpu.dot_dimension_numbers<[2], [0], [0, 1], [1], [0, 0, 0, 1, 1, 1], [], []>} : vector<2x8x64xf32>, vector<64x60xf32>, vector<2x8x60xf32> -> vector<2x8x60xf32>
    %cst_12 = arith.constant 0.000000e+00 : f32
    "tpu.trace_stop"() : () -> ()
    %8 = vector.broadcast %cst_12 : f32 to vector<2x8x64xf32>
    %9 = vector.extract_strided_slice %5 {offsets = [0, 0, 0], sizes = [2, 8, 10], strides = [1, 1, 1]} : vector<2x8x60xf32> to vector<2x8x10xf32>
    %10 = vector.extract_strided_slice %6 {offsets = [0, 0, 0], sizes = [2, 8, 10], strides = [1, 1, 1]} : vector<2x8x60xf32> to vector<2x8x10xf32>
    %11 = vector.extract_strided_slice %7 {offsets = [0, 0, 0], sizes = [2, 8, 10], strides = [1, 1, 1]} : vector<2x8x60xf32> to vector<2x8x10xf32>
    "tpu.trace_start"() <{level = 10 : i32, message = "btd,bud->btu"}> : () -> ()
    %cst_13 = arith.constant dense<0.000000e+00> : vector<2x8x8xf32>
    %12 = tpu.matmul %9, %10, %cst_13 {dimension_numbers = #tpu.dot_dimension_numbers<[2], [2], [1], [1], [0, 0, 0, 1, 1, 1], [0], [0]>} : vector<2x8x10xf32>, vector<2x8x10xf32>, vector<2x8x8xf32> -> vector<2x8x8xf32>
    "tpu.trace_stop"() : () -> ()
    %13 = vector.shape_cast %1 : vector<8x8xf32> to vector<1x8x8xf32>
    %14 = vector.broadcast %13 : vector<1x8x8xf32> to vector<2x8x8xf32>
    %15 = arith.addf %12, %14 : vector<2x8x8xf32>
    %cst_14 = arith.constant dense<0xFF800000> : vector<2x8xf32>
    %16 = vector.multi_reduction <maximumf>, %15, %cst_14 [2] : vector<2x8x8xf32> to vector<2x8xf32>
    %17 = vector.shape_cast %16 : vector<2x8xf32> to vector<2x8x1xf32>
    %18 = vector.broadcast %17 : vector<2x8x1xf32> to vector<2x8x8xf32>
    %19 = arith.subf %15, %18 : vector<2x8x8xf32>
    %20 = math.exp %19 : vector<2x8x8xf32>
    %cst_15 = arith.constant dense<0.000000e+00> : vector<2x8xf32>
    %21 = vector.multi_reduction <add>, %20, %cst_15 [2] : vector<2x8x8xf32> to vector<2x8xf32>
    %22 = vector.shape_cast %21 : vector<2x8xf32> to vector<2x8x1xf32>
    %23 = tpu.reciprocal %22 {approx = true} : vector<2x8x1xf32> -> vector<2x8x1xf32>
    %24 = vector.broadcast %23 : vector<2x8x1xf32> to vector<2x8x8xf32>
    %25 = arith.mulf %20, %24 : vector<2x8x8xf32>
    "tpu.trace_start"() <{level = 10 : i32, message = "btu,bud->btd"}> : () -> ()
    %cst_16 = arith.constant dense<0.000000e+00> : vector<2x8x10xf32>
    %26 = tpu.matmul %25, %11, %cst_16 {dimension_numbers = #tpu.dot_dimension_numbers<[2], [1], [1], [2], [0, 0, 0, 1, 1, 2], [0], [0]>} : vector<2x8x8xf32>, vector<2x8x10xf32>, vector<2x8x10xf32> -> vector<2x8x10xf32>
    "tpu.trace_stop"() : () -> ()
    %c0_17 = arith.constant 0 : index
    %c0_18 = arith.constant 0 : index
    %c0_19 = arith.constant 0 : index
    %27 = vector.load %arg6[%c0_17, %c0_18, %c0_19] : memref<6x10x64xf32, #tpu.memory_space<vmem>>, vector<1x10x64xf32>
    %28 = vector.shape_cast %27 : vector<1x10x64xf32> to vector<10x64xf32>
    "tpu.trace_start"() <{level = 10 : i32, message = "btd,dc->btc"}> : () -> ()
    %cst_20 = arith.constant dense<0.000000e+00> : vector<2x8x64xf32>
    %29 = tpu.matmul %26, %28, %cst_20 {dimension_numbers = #tpu.dot_dimension_numbers<[2], [0], [0, 1], [1], [0, 0, 0, 1, 1, 1], [], []>} : vector<2x8x10xf32>, vector<10x64xf32>, vector<2x8x64xf32> -> vector<2x8x64xf32>
    "tpu.trace_stop"() : () -> ()
    %30 = arith.addf %8, %29 : vector<2x8x64xf32>
    %31 = vector.extract_strided_slice %5 {offsets = [0, 0, 10], sizes = [2, 8, 10], strides = [1, 1, 1]} : vector<2x8x60xf32> to vector<2x8x10xf32>
    %32 = vector.extract_strided_slice %6 {offsets = [0, 0, 10], sizes = [2, 8, 10], strides = [1, 1, 1]} : vector<2x8x60xf32> to vector<2x8x10xf32>
    %33 = vector.extract_strided_slice %7 {offsets = [0, 0, 10], sizes = [2, 8, 10], strides = [1, 1, 1]} : vector<2x8x60xf32> to vector<2x8x10xf32>
    "tpu.trace_start"() <{level = 10 : i32, message = "btd,bud->btu"}> : () -> ()
    %cst_21 = arith.constant dense<0.000000e+00> : vector<2x8x8xf32>
    %34 = tpu.matmul %31, %32, %cst_21 {dimension_numbers = #tpu.dot_dimension_numbers<[2], [2], [1], [1], [0, 0, 0, 1, 1, 1], [0], [0]>} : vector<2x8x10xf32>, vector<2x8x10xf32>, vector<2x8x8xf32> -> vector<2x8x8xf32>
    "tpu.trace_stop"() : () -> ()
    %35 = vector.shape_cast %1 : vector<8x8xf32> to vector<1x8x8xf32>
    %36 = vector.broadcast %35 : vector<1x8x8xf32> to vector<2x8x8xf32>
    %37 = arith.addf %34, %36 : vector<2x8x8xf32>
    %cst_22 = arith.constant dense<0xFF800000> : vector<2x8xf32>
    %38 = vector.multi_reduction <maximumf>, %37, %cst_22 [2] : vector<2x8x8xf32> to vector<2x8xf32>
    %39 = vector.shape_cast %38 : vector<2x8xf32> to vector<2x8x1xf32>
    %40 = vector.broadcast %39 : vector<2x8x1xf32> to vector<2x8x8xf32>
    %41 = arith.subf %37, %40 : vector<2x8x8xf32>
    %42 = math.exp %41 : vector<2x8x8xf32>
    %cst_23 = arith.constant dense<0.000000e+00> : vector<2x8xf32>
    %43 = vector.multi_reduction <add>, %42, %cst_23 [2] : vector<2x8x8xf32> to vector<2x8xf32>
    %44 = vector.shape_cast %43 : vector<2x8xf32> to vector<2x8x1xf32>
    %45 = tpu.reciprocal %44 {approx = true} : vector<2x8x1xf32> -> vector<2x8x1xf32>
    %46 = vector.broadcast %45 : vector<2x8x1xf32> to vector<2x8x8xf32>
    %47 = arith.mulf %42, %46 : vector<2x8x8xf32>
    "tpu.trace_start"() <{level = 10 : i32, message = "btu,bud->btd"}> : () -> ()
    %cst_24 = arith.constant dense<0.000000e+00> : vector<2x8x10xf32>
    %48 = tpu.matmul %47, %33, %cst_24 {dimension_numbers = #tpu.dot_dimension_numbers<[2], [1], [1], [2], [0, 0, 0, 1, 1, 2], [0], [0]>} : vector<2x8x8xf32>, vector<2x8x10xf32>, vector<2x8x10xf32> -> vector<2x8x10xf32>
    "tpu.trace_stop"() : () -> ()
    %c1 = arith.constant 1 : index
    %c0_25 = arith.constant 0 : index
    %c0_26 = arith.constant 0 : index
    %49 = vector.load %arg6[%c1, %c0_25, %c0_26] : memref<6x10x64xf32, #tpu.memory_space<vmem>>, vector<1x10x64xf32>
    %50 = vector.shape_cast %49 : vector<1x10x64xf32> to vector<10x64xf32>
    "tpu.trace_start"() <{level = 10 : i32, message = "btd,dc->btc"}> : () -> ()
    %cst_27 = arith.constant dense<0.000000e+00> : vector<2x8x64xf32>
    %51 = tpu.matmul %48, %50, %cst_27 {dimension_numbers = #tpu.dot_dimension_numbers<[2], [0], [0, 1], [1], [0, 0, 0, 1, 1, 1], [], []>} : vector<2x8x10xf32>, vector<10x64xf32>, vector<2x8x64xf32> -> vector<2x8x64xf32>
    "tpu.trace_stop"() : () -> ()
    %52 = arith.addf %30, %51 : vector<2x8x64xf32>
    %53 = vector.extract_strided_slice %5 {offsets = [0, 0, 20], sizes = [2, 8, 10], strides = [1, 1, 1]} : vector<2x8x60xf32> to vector<2x8x10xf32>
    %54 = vector.extract_strided_slice %6 {offsets = [0, 0, 20], sizes = [2, 8, 10], strides = [1, 1, 1]} : vector<2x8x60xf32> to vector<2x8x10xf32>
    %55 = vector.extract_strided_slice %7 {offsets = [0, 0, 20], sizes = [2, 8, 10], strides = [1, 1, 1]} : vector<2x8x60xf32> to vector<2x8x10xf32>
    "tpu.trace_start"() <{level = 10 : i32, message = "btd,bud->btu"}> : () -> ()
    %cst_28 = arith.constant dense<0.000000e+00> : vector<2x8x8xf32>
    %56 = tpu.matmul %53, %54, %cst_28 {dimension_numbers = #tpu.dot_dimension_numbers<[2], [2], [1], [1], [0, 0, 0, 1, 1, 1], [0], [0]>} : vector<2x8x10xf32>, vector<2x8x10xf32>, vector<2x8x8xf32> -> vector<2x8x8xf32>
    "tpu.trace_stop"() : () -> ()
    %57 = vector.shape_cast %1 : vector<8x8xf32> to vector<1x8x8xf32>
    %58 = vector.broadcast %57 : vector<1x8x8xf32> to vector<2x8x8xf32>
    %59 = arith.addf %56, %58 : vector<2x8x8xf32>
    %cst_29 = arith.constant dense<0xFF800000> : vector<2x8xf32>
    %60 = vector.multi_reduction <maximumf>, %59, %cst_29 [2] : vector<2x8x8xf32> to vector<2x8xf32>
    %61 = vector.shape_cast %60 : vector<2x8xf32> to vector<2x8x1xf32>
    %62 = vector.broadcast %61 : vector<2x8x1xf32> to vector<2x8x8xf32>
    %63 = arith.subf %59, %62 : vector<2x8x8xf32>
    %64 = math.exp %63 : vector<2x8x8xf32>
    %cst_30 = arith.constant dense<0.000000e+00> : vector<2x8xf32>
    %65 = vector.multi_reduction <add>, %64, %cst_30 [2] : vector<2x8x8xf32> to vector<2x8xf32>
    %66 = vector.shape_cast %65 : vector<2x8xf32> to vector<2x8x1xf32>
    %67 = tpu.reciprocal %66 {approx = true} : vector<2x8x1xf32> -> vector<2x8x1xf32>
    %68 = vector.broadcast %67 : vector<2x8x1xf32> to vector<2x8x8xf32>
    %69 = arith.mulf %64, %68 : vector<2x8x8xf32>
    "tpu.trace_start"() <{level = 10 : i32, message = "btu,bud->btd"}> : () -> ()
    %cst_31 = arith.constant dense<0.000000e+00> : vector<2x8x10xf32>
    %70 = tpu.matmul %69, %55, %cst_31 {dimension_numbers = #tpu.dot_dimension_numbers<[2], [1], [1], [2], [0, 0, 0, 1, 1, 2], [0], [0]>} : vector<2x8x8xf32>, vector<2x8x10xf32>, vector<2x8x10xf32> -> vector<2x8x10xf32>
    "tpu.trace_stop"() : () -> ()
    %c2 = arith.constant 2 : index
    %c0_32 = arith.constant 0 : index
    %c0_33 = arith.constant 0 : index
    %71 = vector.load %arg6[%c2, %c0_32, %c0_33] : memref<6x10x64xf32, #tpu.memory_space<vmem>>, vector<1x10x64xf32>
    %72 = vector.shape_cast %71 : vector<1x10x64xf32> to vector<10x64xf32>
    "tpu.trace_start"() <{level = 10 : i32, message = "btd,dc->btc"}> : () -> ()
    %cst_34 = arith.constant dense<0.000000e+00> : vector<2x8x64xf32>
    %73 = tpu.matmul %70, %72, %cst_34 {dimension_numbers = #tpu.dot_dimension_numbers<[2], [0], [0, 1], [1], [0, 0, 0, 1, 1, 1], [], []>} : vector<2x8x10xf32>, vector<10x64xf32>, vector<2x8x64xf32> -> vector<2x8x64xf32>
    "tpu.trace_stop"() : () -> ()
    %74 = arith.addf %52, %73 : vector<2x8x64xf32>
    %75 = vector.extract_strided_slice %5 {offsets = [0, 0, 30], sizes = [2, 8, 10], strides = [1, 1, 1]} : vector<2x8x60xf32> to vector<2x8x10xf32>
    %76 = vector.extract_strided_slice %6 {offsets = [0, 0, 30], sizes = [2, 8, 10], strides = [1, 1, 1]} : vector<2x8x60xf32> to vector<2x8x10xf32>
    %77 = vector.extract_strided_slice %7 {offsets = [0, 0, 30], sizes = [2, 8, 10], strides = [1, 1, 1]} : vector<2x8x60xf32> to vector<2x8x10xf32>
    "tpu.trace_start"() <{level = 10 : i32, message = "btd,bud->btu"}> : () -> ()
    %cst_35 = arith.constant dense<0.000000e+00> : vector<2x8x8xf32>
    %78 = tpu.matmul %75, %76, %cst_35 {dimension_numbers = #tpu.dot_dimension_numbers<[2], [2], [1], [1], [0, 0, 0, 1, 1, 1], [0], [0]>} : vector<2x8x10xf32>, vector<2x8x10xf32>, vector<2x8x8xf32> -> vector<2x8x8xf32>
    "tpu.trace_stop"() : () -> ()
    %79 = vector.shape_cast %1 : vector<8x8xf32> to vector<1x8x8xf32>
    %80 = vector.broadcast %79 : vector<1x8x8xf32> to vector<2x8x8xf32>
    %81 = arith.addf %78, %80 : vector<2x8x8xf32>
    %cst_36 = arith.constant dense<0xFF800000> : vector<2x8xf32>
    %82 = vector.multi_reduction <maximumf>, %81, %cst_36 [2] : vector<2x8x8xf32> to vector<2x8xf32>
    %83 = vector.shape_cast %82 : vector<2x8xf32> to vector<2x8x1xf32>
    %84 = vector.broadcast %83 : vector<2x8x1xf32> to vector<2x8x8xf32>
    %85 = arith.subf %81, %84 : vector<2x8x8xf32>
    %86 = math.exp %85 : vector<2x8x8xf32>
    %cst_37 = arith.constant dense<0.000000e+00> : vector<2x8xf32>
    %87 = vector.multi_reduction <add>, %86, %cst_37 [2] : vector<2x8x8xf32> to vector<2x8xf32>
    %88 = vector.shape_cast %87 : vector<2x8xf32> to vector<2x8x1xf32>
    %89 = tpu.reciprocal %88 {approx = true} : vector<2x8x1xf32> -> vector<2x8x1xf32>
    %90 = vector.broadcast %89 : vector<2x8x1xf32> to vector<2x8x8xf32>
    %91 = arith.mulf %86, %90 : vector<2x8x8xf32>
    "tpu.trace_start"() <{level = 10 : i32, message = "btu,bud->btd"}> : () -> ()
    %cst_38 = arith.constant dense<0.000000e+00> : vector<2x8x10xf32>
    %92 = tpu.matmul %91, %77, %cst_38 {dimension_numbers = #tpu.dot_dimension_numbers<[2], [1], [1], [2], [0, 0, 0, 1, 1, 2], [0], [0]>} : vector<2x8x8xf32>, vector<2x8x10xf32>, vector<2x8x10xf32> -> vector<2x8x10xf32>
    "tpu.trace_stop"() : () -> ()
    %c3 = arith.constant 3 : index
    %c0_39 = arith.constant 0 : index
    %c0_40 = arith.constant 0 : index
    %93 = vector.load %arg6[%c3, %c0_39, %c0_40] : memref<6x10x64xf32, #tpu.memory_space<vmem>>, vector<1x10x64xf32>
    %94 = vector.shape_cast %93 : vector<1x10x64xf32> to vector<10x64xf32>
    "tpu.trace_start"() <{level = 10 : i32, message = "btd,dc->btc"}> : () -> ()
    %cst_41 = arith.constant dense<0.000000e+00> : vector<2x8x64xf32>
    %95 = tpu.matmul %92, %94, %cst_41 {dimension_numbers = #tpu.dot_dimension_numbers<[2], [0], [0, 1], [1], [0, 0, 0, 1, 1, 1], [], []>} : vector<2x8x10xf32>, vector<10x64xf32>, vector<2x8x64xf32> -> vector<2x8x64xf32>
    "tpu.trace_stop"() : () -> ()
    %96 = arith.addf %74, %95 : vector<2x8x64xf32>
    %97 = vector.extract_strided_slice %5 {offsets = [0, 0, 40], sizes = [2, 8, 10], strides = [1, 1, 1]} : vector<2x8x60xf32> to vector<2x8x10xf32>
    %98 = vector.extract_strided_slice %6 {offsets = [0, 0, 40], sizes = [2, 8, 10], strides = [1, 1, 1]} : vector<2x8x60xf32> to vector<2x8x10xf32>
    %99 = vector.extract_strided_slice %7 {offsets = [0, 0, 40], sizes = [2, 8, 10], strides = [1, 1, 1]} : vector<2x8x60xf32> to vector<2x8x10xf32>
    "tpu.trace_start"() <{level = 10 : i32, message = "btd,bud->btu"}> : () -> ()
    %cst_42 = arith.constant dense<0.000000e+00> : vector<2x8x8xf32>
    %100 = tpu.matmul %97, %98, %cst_42 {dimension_numbers = #tpu.dot_dimension_numbers<[2], [2], [1], [1], [0, 0, 0, 1, 1, 1], [0], [0]>} : vector<2x8x10xf32>, vector<2x8x10xf32>, vector<2x8x8xf32> -> vector<2x8x8xf32>
    "tpu.trace_stop"() : () -> ()
    %101 = vector.shape_cast %1 : vector<8x8xf32> to vector<1x8x8xf32>
    %102 = vector.broadcast %101 : vector<1x8x8xf32> to vector<2x8x8xf32>
    %103 = arith.addf %100, %102 : vector<2x8x8xf32>
    %cst_43 = arith.constant dense<0xFF800000> : vector<2x8xf32>
    %104 = vector.multi_reduction <maximumf>, %103, %cst_43 [2] : vector<2x8x8xf32> to vector<2x8xf32>
    %105 = vector.shape_cast %104 : vector<2x8xf32> to vector<2x8x1xf32>
    %106 = vector.broadcast %105 : vector<2x8x1xf32> to vector<2x8x8xf32>
    %107 = arith.subf %103, %106 : vector<2x8x8xf32>
    %108 = math.exp %107 : vector<2x8x8xf32>
    %cst_44 = arith.constant dense<0.000000e+00> : vector<2x8xf32>
    %109 = vector.multi_reduction <add>, %108, %cst_44 [2] : vector<2x8x8xf32> to vector<2x8xf32>
    %110 = vector.shape_cast %109 : vector<2x8xf32> to vector<2x8x1xf32>
    %111 = tpu.reciprocal %110 {approx = true} : vector<2x8x1xf32> -> vector<2x8x1xf32>
    %112 = vector.broadcast %111 : vector<2x8x1xf32> to vector<2x8x8xf32>
    %113 = arith.mulf %108, %112 : vector<2x8x8xf32>
    "tpu.trace_start"() <{level = 10 : i32, message = "btu,bud->btd"}> : () -> ()
    %cst_45 = arith.constant dense<0.000000e+00> : vector<2x8x10xf32>
    %114 = tpu.matmul %113, %99, %cst_45 {dimension_numbers = #tpu.dot_dimension_numbers<[2], [1], [1], [2], [0, 0, 0, 1, 1, 2], [0], [0]>} : vector<2x8x8xf32>, vector<2x8x10xf32>, vector<2x8x10xf32> -> vector<2x8x10xf32>
    "tpu.trace_stop"() : () -> ()
    %c4 = arith.constant 4 : index
    %c0_46 = arith.constant 0 : index
    %c0_47 = arith.constant 0 : index
    %115 = vector.load %arg6[%c4, %c0_46, %c0_47] : memref<6x10x64xf32, #tpu.memory_space<vmem>>, vector<1x10x64xf32>
    %116 = vector.shape_cast %115 : vector<1x10x64xf32> to vector<10x64xf32>
    "tpu.trace_start"() <{level = 10 : i32, message = "btd,dc->btc"}> : () -> ()
    %cst_48 = arith.constant dense<0.000000e+00> : vector<2x8x64xf32>
    %117 = tpu.matmul %114, %116, %cst_48 {dimension_numbers = #tpu.dot_dimension_numbers<[2], [0], [0, 1], [1], [0, 0, 0, 1, 1, 1], [], []>} : vector<2x8x10xf32>, vector<10x64xf32>, vector<2x8x64xf32> -> vector<2x8x64xf32>
    "tpu.trace_stop"() : () -> ()
    %118 = arith.addf %96, %117 : vector<2x8x64xf32>
    %119 = vector.extract_strided_slice %5 {offsets = [0, 0, 50], sizes = [2, 8, 10], strides = [1, 1, 1]} : vector<2x8x60xf32> to vector<2x8x10xf32>
    %120 = vector.extract_strided_slice %6 {offsets = [0, 0, 50], sizes = [2, 8, 10], strides = [1, 1, 1]} : vector<2x8x60xf32> to vector<2x8x10xf32>
    %121 = vector.extract_strided_slice %7 {offsets = [0, 0, 50], sizes = [2, 8, 10], strides = [1, 1, 1]} : vector<2x8x60xf32> to vector<2x8x10xf32>
    "tpu.trace_start"() <{level = 10 : i32, message = "btd,bud->btu"}> : () -> ()
    %cst_49 = arith.constant dense<0.000000e+00> : vector<2x8x8xf32>
    %122 = tpu.matmul %119, %120, %cst_49 {dimension_numbers = #tpu.dot_dimension_numbers<[2], [2], [1], [1], [0, 0, 0, 1, 1, 1], [0], [0]>} : vector<2x8x10xf32>, vector<2x8x10xf32>, vector<2x8x8xf32> -> vector<2x8x8xf32>
    "tpu.trace_stop"() : () -> ()
    %123 = vector.shape_cast %1 : vector<8x8xf32> to vector<1x8x8xf32>
    %124 = vector.broadcast %123 : vector<1x8x8xf32> to vector<2x8x8xf32>
    %125 = arith.addf %122, %124 : vector<2x8x8xf32>
    %cst_50 = arith.constant dense<0xFF800000> : vector<2x8xf32>
    %126 = vector.multi_reduction <maximumf>, %125, %cst_50 [2] : vector<2x8x8xf32> to vector<2x8xf32>
    %127 = vector.shape_cast %126 : vector<2x8xf32> to vector<2x8x1xf32>
    %128 = vector.broadcast %127 : vector<2x8x1xf32> to vector<2x8x8xf32>
    %129 = arith.subf %125, %128 : vector<2x8x8xf32>
    %130 = math.exp %129 : vector<2x8x8xf32>
    %cst_51 = arith.constant dense<0.000000e+00> : vector<2x8xf32>
    %131 = vector.multi_reduction <add>, %130, %cst_51 [2] : vector<2x8x8xf32> to vector<2x8xf32>
    %132 = vector.shape_cast %131 : vector<2x8xf32> to vector<2x8x1xf32>
    %133 = tpu.reciprocal %132 {approx = true} : vector<2x8x1xf32> -> vector<2x8x1xf32>
    %134 = vector.broadcast %133 : vector<2x8x1xf32> to vector<2x8x8xf32>
    %135 = arith.mulf %130, %134 : vector<2x8x8xf32>
    "tpu.trace_start"() <{level = 10 : i32, message = "btu,bud->btd"}> : () -> ()
    %cst_52 = arith.constant dense<0.000000e+00> : vector<2x8x10xf32>
    %136 = tpu.matmul %135, %121, %cst_52 {dimension_numbers = #tpu.dot_dimension_numbers<[2], [1], [1], [2], [0, 0, 0, 1, 1, 2], [0], [0]>} : vector<2x8x8xf32>, vector<2x8x10xf32>, vector<2x8x10xf32> -> vector<2x8x10xf32>
    "tpu.trace_stop"() : () -> ()
    %c5 = arith.constant 5 : index
    %c0_53 = arith.constant 0 : index
    %c0_54 = arith.constant 0 : index
    %137 = vector.load %arg6[%c5, %c0_53, %c0_54] : memref<6x10x64xf32, #tpu.memory_space<vmem>>, vector<1x10x64xf32>
    %138 = vector.shape_cast %137 : vector<1x10x64xf32> to vector<10x64xf32>
    "tpu.trace_start"() <{level = 10 : i32, message = "btd,dc->btc"}> : () -> ()
    %cst_55 = arith.constant dense<0.000000e+00> : vector<2x8x64xf32>
    %139 = tpu.matmul %136, %138, %cst_55 {dimension_numbers = #tpu.dot_dimension_numbers<[2], [0], [0, 1], [1], [0, 0, 0, 1, 1, 1], [], []>} : vector<2x8x10xf32>, vector<10x64xf32>, vector<2x8x64xf32> -> vector<2x8x64xf32>
    "tpu.trace_stop"() : () -> ()
    %140 = arith.addf %118, %139 : vector<2x8x64xf32>
    %c0_56 = arith.constant 0 : index
    %c0_57 = arith.constant 0 : index
    %141 = vector.load %arg7[%c0_56, %c0_57] : memref<1x64xf32, #tpu.memory_space<vmem>>, vector<1x64xf32>
    %142 = vector.shape_cast %141 : vector<1x64xf32> to vector<1x1x64xf32>
    %143 = vector.broadcast %142 : vector<1x1x64xf32> to vector<2x8x64xf32>
    %144 = arith.addf %140, %143 : vector<2x8x64xf32>
    %c0_58 = arith.constant 0 : index
    %c0_59 = arith.constant 0 : index
    %c0_60 = arith.constant 0 : index
    %145 = vector.load %arg8[%c0_58, %c0_59, %c0_60] : memref<2x8x64xf32, #tpu.memory_space<vmem>>, vector<2x8x64xf32>
    tpu.vector_store %arg8[%c0_58, %c0_59, %c0_60], %144 {strides = array<i32>} : memref<2x8x64xf32, #tpu.memory_space<vmem>>, vector<2x8x64xf32>,
    return
  }
  func.func @transform_0(%arg0: i32) -> (i32, i32, i32) {
    %c0_i32 = arith.constant 0 : i32
    %c0_i32_0 = arith.constant 0 : i32
    %c0_i32_1 = arith.constant 0 : i32
    return %arg0, %c0_i32, %c0_i32_0 : i32, i32, i32
  }
  func.func @transform_1(%arg0: i32) -> (i32, i32) {
    %c0_i32 = arith.constant 0 : i32
    %c0_i32_0 = arith.constant 0 : i32
    %c0_i32_1 = arith.constant 0 : i32
    return %c0_i32, %c0_i32_0 : i32, i32
  }
  func.func @transform_2(%arg0: i32) -> (i32, i32) {
    %c0_i32 = arith.constant 0 : i32
    %c0_i32_0 = arith.constant 0 : i32
    %c0_i32_1 = arith.constant 0 : i32
    return %c0_i32, %c0_i32_0 : i32, i32
  }
  func.func @transform_3(%arg0: i32) -> (i32, i32) {
    %c0_i32 = arith.constant 0 : i32
    %c0_i32_0 = arith.constant 0 : i32
    %c0_i32_1 = arith.constant 0 : i32
    return %c0_i32, %c0_i32_0 : i32, i32
  }
  func.func @transform_4(%arg0: i32) -> (i32, i32) {
    %c0_i32 = arith.constant 0 : i32
    %c0_i32_0 = arith.constant 0 : i32
    %c0_i32_1 = arith.constant 0 : i32
    return %c0_i32, %c0_i32_0 : i32, i32
  }
  func.func @transform_5(%arg0: i32) -> (i32, i32, i32) {
    %c0_i32 = arith.constant 0 : i32
    %c0_i32_0 = arith.constant 0 : i32
    %c0_i32_1 = arith.constant 0 : i32
    %c0_i32_2 = arith.constant 0 : i32
    return %c0_i32, %c0_i32_0, %c0_i32_1 : i32, i32, i32
  }
  func.func @transform_6(%arg0: i32) -> (i32, i32) {
    %c0_i32 = arith.constant 0 : i32
    %c0_i32_0 = arith.constant 0 : i32
    %c0_i32_1 = arith.constant 0 : i32
    return %c0_i32, %c0_i32_0 : i32, i32
  }
  func.func @transform_7(%arg0: i32) -> (i32, i32, i32) {
    %c0_i32 = arith.constant 0 : i32
    %c0_i32_0 = arith.constant 0 : i32
    %c0_i32_1 = arith.constant 0 : i32
    return %arg0, %c0_i32, %c0_i32_0 : i32, i32, i32
  }
}

</mosaic_0001>

<llo_original>
// kernel: tpu_custom_call.1
$region0: #{tpu_custom_call.1}
  #allocation0 [shape = 'u32[]', space=smem, size = 0x4, offset = 0x4, fixed_abs, tag = 'smem constant byte address 0x4 - core index']
  #allocation1 [shape = 'u32[72,128]{1,0:T(1,128)}', space=vmem, size = 0x9000, scoped, tag = 'internal scratch']
  %s0 = inlined_call_operand.vmem [shape: f32[2,8,64], index: 0, kind: input, shape index: {}]
  %s1 = inlined_call_operand.vmem [shape: f32[8,8], index: 1, kind: input, shape index: {}]
  %s2 = inlined_call_operand.vmem [shape: f32[64,60], index: 2, kind: input, shape index: {}]
  %s3 = inlined_call_operand.vmem [shape: f32[64,60], index: 3, kind: input, shape index: {}]
  %s4 = inlined_call_operand.hbm [shape: f32[64,60], index: 4, kind: input, shape index: {}]
  %s5 = inlined_call_operand.vmem [shape: f32[6,10,64], index: 5, kind: input, shape index: {}]
  %s6 = inlined_call_operand.vmem [shape: f32[1,64], index: 6, kind: input, shape index: {}]
  %s7 = inlined_call_operand.hbm [shape: f32[2,8,64], index: 7, kind: output, shape index: {}]
  %s8 = sld [smem:[#allocation0]]
  $region42: #{tpu_custom_call.1} parent=0
    _
  %s10 = ssub.s32 1, %s8
  %s11 = scalar_select 0, %s10, %s8
  $region1: #{tpu_custom_call.1} parent=0
    #allocation2 [shape = 'u8[32768]{0}', space=vmem, size = 0x8000, scoped, tag = 'input window, operand 4, single buffered']
    #allocation3 [shape = 's32[1]{0}', space=sflag, size = 0x4, scoped, tag = 'scoped memory for tpu_custom_call.1']
    #allocation4 [shape = 's32[1]{0}', space=sflag, size = 0x4, scoped, tag = 'scoped memory for tpu_custom_call.1']
    #allocation5 [shape = 'u8[8192]{0}', space=vmem, size = 0x2000, scoped, tag = 'output window, operand 0, single buffered']
    %12 = vsyncpa [#allocation3], 0
    %13 = vsyncpa [#allocation4], 0
    // Predicated region
    $region2: #{tpu_custom_call.1} parent=1 // pred_check
      _
    $region3: #{tpu_custom_call.1} parent=1 // pred_check_branch
      %15 = sbr.rel (0) target = $region5
    $region4: #{tpu_custom_call.1} parent=1 // pred_region
      _
    $region5: #{tpu_custom_call.1} parent=1 // pred_fallthru
      _
    // Predicated region
    $region6: #{tpu_custom_call.1} parent=1 // pred_check
      _
    $region7: #{tpu_custom_call.1} parent=1 // pred_check_branch
      %17 = sbr.rel (0) target = $region9
    $region8: #{tpu_custom_call.1} parent=1 // pred_region
      _
    $region9: #{tpu_custom_call.1} parent=1 // pred_fallthru
      _
    // Predicated region
    $region10: #{tpu_custom_call.1} parent=1 // pred_check
      _
    $region11: #{tpu_custom_call.1} parent=1 // pred_check_branch
      %19 = sbr.rel (0) target = $region13
    $region12: #{tpu_custom_call.1} parent=1 // pred_region
      _
    $region13: #{tpu_custom_call.1} parent=1 // pred_fallthru
      _
    // Predicated region
    $region14: #{tpu_custom_call.1} parent=1 // pred_check
      _
    $region15: #{tpu_custom_call.1} parent=1 // pred_check_branch
      %21 = sbr.rel (0) target = $region17
    $region16: #{tpu_custom_call.1} parent=1 // pred_region
      _
    $region17: #{tpu_custom_call.1} parent=1 // pred_fallthru
      _
    // Predicated region
    $region18: #{tpu_custom_call.1} parent=1 // pred_check
      _
    $region19: #{tpu_custom_call.1} parent=1 // pred_check_branch
      %23 = sbr.rel (0) target = $region21
    $region20: #{tpu_custom_call.1} parent=1 // pred_region
      %25 = vsyncadd [#allocation3], 0
      %s26 = sshll.u32 %s4, 4
      %s27 = int_to_ptr.hbm [resolvable:$true] %s26
      %s28 = sshll.u32 [#allocation2], 4
      %s29 = int_to_ptr.vmem [resolvable:$true] %s28
      %34 = dma.hbm_to_vmem [thread:$0]  %s27, 1024, %s29, [#allocation3], 128, 128, 8
    $region21: #{tpu_custom_call.1} parent=1 // pred_fallthru
      _
    // Predicated region
    $region22: #{tpu_custom_call.1} parent=1 // pred_check
      _
    $region23: #{tpu_custom_call.1} parent=1 // pred_check_branch
      %36 = sbr.rel (0) target = $region25
    $region24: #{tpu_custom_call.1} parent=1 // pred_region
      _
    $region25: #{tpu_custom_call.1} parent=1 // pred_fallthru
      _
    // Predicated region
    $region26: #{tpu_custom_call.1} parent=1 // pred_check
      _
    $region27: #{tpu_custom_call.1} parent=1 // pred_check_branch
      %38 = sbr.rel (0) target = $region29
    $region28: #{tpu_custom_call.1} parent=1 // pred_region
      _
    $region29: #{tpu_custom_call.1} parent=1 // pred_fallthru
      _
    // Predicated region
    $region30: #{tpu_custom_call.1} parent=1 // pred_check
      _
    $region31: #{tpu_custom_call.1} parent=1 // pred_check_branch
      %40 = sbr.rel (0) target = $region33
    $region32: #{tpu_custom_call.1} parent=1 // pred_region
      %42 = dma.done [#allocation3], 1024
    $region33: #{tpu_custom_call.1} parent=1 // pred_fallthru
      _
    %v43 = vld [vmem:[%s0] sm:$0xff]
    %v44 = vld [vmem:[%s0 + $0x8] sm:$0xff]
    %v45 = vld [vmem:[%s1] sm:$0xff]
    %v46 = vld [vmem:[%s2] sm:$0xff]
    %v47 = vld [vmem:[%s2 + $0x8] sm:$0xff]
    %v48 = vld [vmem:[%s2 + $0x10] sm:$0xff]
    %v49 = vld [vmem:[%s2 + $0x18] sm:$0xff]
    %v50 = vld [vmem:[%s2 + $0x20] sm:$0xff]
    %v51 = vld [vmem:[%s2 + $0x28] sm:$0xff]
    %v52 = vld [vmem:[%s2 + $0x30] sm:$0xff]
    %v53 = vld [vmem:[%s2 + $0x38] sm:$0xff]
    %v54 = vld [vmem:[%s3] sm:$0xff]
    %v55 = vld [vmem:[%s3 + $0x8] sm:$0xff]
    %v56 = vld [vmem:[%s3 + $0x10] sm:$0xff]
    %v57 = vld [vmem:[%s3 + $0x18] sm:$0xff]
    %v58 = vld [vmem:[%s3 + $0x20] sm:$0xff]
    %v59 = vld [vmem:[%s3 + $0x28] sm:$0xff]
    %v60 = vld [vmem:[%s3 + $0x30] sm:$0xff]
    %v61 = vld [vmem:[%s3 + $0x38] sm:$0xff]
    %v62 = vld [vmem:[#allocation2] sm:$0xff]
    %v63 = vld [vmem:[#allocation2 + $0x8] sm:$0xff]
    %v64 = vld [vmem:[#allocation2 + $0x10] sm:$0xff]
    %v65 = vld [vmem:[#allocation2 + $0x18] sm:$0xff]
    %v66 = vld [vmem:[#allocation2 + $0x20] sm:$0xff]
    %v67 = vld [vmem:[#allocation2 + $0x28] sm:$0xff]
    %v68 = vld [vmem:[#allocation2 + $0x30] sm:$0xff]
    %v69 = vld [vmem:[#allocation2 + $0x38] sm:$0xff]
    %vm70 = vcmask 523264
    %v72 = vsel %vm70, %v43, 0
    %v75 = vsel %vm70, %v44, 0
    %77 = vmatpush.msra.mxu0 0.0
    %78 = vmatpush.msra.mxu0 0.0
    %79 = vmatpush.msra.mxu0 0.0
    %80 = vmatpush.msra.mxu0 0.0
    %81 = vmatpush.msra.mxu0 0.0
    %82 = vmatpush.msra.mxu0 0.0
    %83 = vmatpush.msra.mxu0 0.0
    %84 = vmatpush.msra.mxu0 0.0
    %85 = vmatpush.msra.mxu0 %v53
    %86 = vmatpush.msra.mxu0 %v52
    %87 = vmatpush.msra.mxu0 %v51
    %88 = vmatpush.msra.mxu0 %v50
    %89 = vmatpush.msra.mxu0 %v49
    %90 = vmatpush.msra.mxu0 %v48
    %91 = vmatpush.msra.mxu0 %v47
    %92 = vmatpush.msra.mxu0 %v46
    %93 = vmatmul.f32.gmra.mxu0 %v72
    %v94 = vpop.f32.mrf.mxu0
    %v95 = vadd.f32 0.0, %v94
    %96 = vmatmul.f32.gmra.mxu0 %v75
    %v97 = vpop.f32.mrf.mxu0
    %v98 = vadd.f32 0.0, %v97
    %99 = vdwg.mxu0
    %100 = vmatpush.msra.mxu0 0.0
    %101 = vmatpush.msra.mxu0 0.0
    %102 = vmatpush.msra.mxu0 0.0
    %103 = vmatpush.msra.mxu0 0.0
    %104 = vmatpush.msra.mxu0 0.0
    %105 = vmatpush.msra.mxu0 0.0
    %106 = vmatpush.msra.mxu0 0.0
    %107 = vmatpush.msra.mxu0 0.0
    %108 = vmatpush.msra.mxu0 %v61
    %109 = vmatpush.msra.mxu0 %v60
    %110 = vmatpush.msra.mxu0 %v59
    %111 = vmatpush.msra.mxu0 %v58
    %112 = vmatpush.msra.mxu0 %v57
    %113 = vmatpush.msra.mxu0 %v56
    %114 = vmatpush.msra.mxu0 %v55
    %115 = vmatpush.msra.mxu0 %v54
    %116 = vmatmul.f32.gmra.mxu0 %v72
    %v117 = vpop.f32.mrf.mxu0
    %v118 = vadd.f32 0.0, %v117
    %119 = vmatmul.f32.gmra.mxu0 %v75
    %v120 = vpop.f32.mrf.mxu0
    %v121 = vadd.f32 0.0, %v120
    %122 = vdwg.mxu0
    %123 = vmatpush.msra.mxu0 0.0
    %124 = vmatpush.msra.mxu0 0.0
    %125 = vmatpush.msra.mxu0 0.0
    %126 = vmatpush.msra.mxu0 0.0
    %127 = vmatpush.msra.mxu0 0.0
    %128 = vmatpush.msra.mxu0 0.0
    %129 = vmatpush.msra.mxu0 0.0
    %130 = vmatpush.msra.mxu0 0.0
    %131 = vmatpush.msra.mxu0 %v69
    %132 = vmatpush.msra.mxu0 %v68
    %133 = vmatpush.msra.mxu0 %v67
    %134 = vmatpush.msra.mxu0 %v66
    %135 = vmatpush.msra.mxu0 %v65
    %136 = vmatpush.msra.mxu0 %v64
    %137 = vmatpush.msra.mxu0 %v63
    %138 = vmatpush.msra.mxu0 %v62
    %139 = vmatmul.f32.gmra.mxu0 %v72
    %v140 = vpop.f32.mrf.mxu0
    %v141 = vadd.f32 0.0, %v140
    %142 = vmatmul.f32.gmra.mxu0 %v75
    %v143 = vpop.f32.mrf.mxu0
    %v144 = vadd.f32 0.0, %v143
    %145 = vdwg.mxu0
    %vm146 = vcmask 80896
    %v148 = vsel %vm146, %v95, 0
    %v151 = vsel %vm146, %v118, 0
    %153 = vmatpush.xpose.msra.mxu0 0.0
    %154 = vmatpush.xpose.msra.mxu0 0.0
    %155 = vmatpush.xpose.msra.mxu0 0.0
    %156 = vmatpush.xpose.msra.mxu0 0.0
    %157 = vmatpush.xpose.msra.mxu0 0.0
    %158 = vmatpush.xpose.msra.mxu0 0.0
    %159 = vmatpush.xpose.msra.mxu0 0.0
    %160 = vmatpush.xpose.msra.mxu0 0.0
    %161 = vmatpush.xpose.msra.mxu0 0.0
    %162 = vmatpush.xpose.msra.mxu0 0.0
    %163 = vmatpush.xpose.msra.mxu0 0.0
    %164 = vmatpush.xpose.msra.mxu0 0.0
    %165 = vmatpush.xpose.msra.mxu0 0.0
    %166 = vmatpush.xpose.msra.mxu0 0.0
    %167 = vmatpush.xpose.msra.mxu0 0.0
    %168 = vmatpush.xpose.msra.mxu0 %v151
    %169 = vmatmul.f32.gmra.mxu0 %v148
    %v170 = vpop.f32.mrf.mxu0
    %v171 = vadd.f32 %v45, %v170
    %172 = vdwg.mxu0
    %v174 = vsel %vm146, %v98, 0
    %v177 = vsel %vm146, %v121, 0
    %179 = vmatpush.xpose.msra.mxu0 0.0
    %180 = vmatpush.xpose.msra.mxu0 0.0
    %181 = vmatpush.xpose.msra.mxu0 0.0
    %182 = vmatpush.xpose.msra.mxu0 0.0
    %183 = vmatpush.xpose.msra.mxu0 0.0
    %184 = vmatpush.xpose.msra.mxu0 0.0
    %185 = vmatpush.xpose.msra.mxu0 0.0
    %186 = vmatpush.xpose.msra.mxu0 0.0
    %187 = vmatpush.xpose.msra.mxu0 0.0
    %188 = vmatpush.xpose.msra.mxu0 0.0
    %189 = vmatpush.xpose.msra.mxu0 0.0
    %190 = vmatpush.xpose.msra.mxu0 0.0
    %191 = vmatpush.xpose.msra.mxu0 0.0
    %192 = vmatpush.xpose.msra.mxu0 0.0
    %193 = vmatpush.xpose.msra.mxu0 0.0
    %194 = vmatpush.xpose.msra.mxu0 %v177
    %195 = vmatmul.f32.gmra.mxu0 %v174
    %v196 = vpop.f32.mrf.mxu0
    %v197 = vadd.f32 %v45, %v196
    %198 = vdwg.mxu0
    %vm199 = vcmask 64512
    %v200 = vsel %vm199, %v171, -inf
    %201 = vmax.xlane.f32.xlu0 %v200
    %v202 = vpop.xlane.xlu0 %201
    %v203 = vsel %vm199, %v197, -inf
    %204 = vmax.xlane.f32.xlu0 %v203
    %v205 = vpop.xlane.xlu0 %204
    %v206 = vsub.f32 %v171, %v202
    %v207 = vsub.f32 %v197, %v205
    %v208 = vmul.f32 %v206, 1.442695
    %v209 = vpow.pop %v208
    %v210 = vmul.f32 %v207, 1.442695
    %v211 = vpow.pop %v210
    %v212 = vsel %vm199, %v209, 0.0
    %213 = vadd.xlane.f32.xlu0 %v212
    %v214 = vpop.xlane.xlu0 %213
    %v215 = vsel %vm199, %v211, 0.0
    %216 = vadd.xlane.f32.xlu0 %v215
    %v217 = vpop.xlane.xlu0 %216
    %v218 = vrcp.pop %v214
    %v219 = vrcp.pop %v217
    %v220 = vmul.f32 %v209, %v218
    %v221 = vmul.f32 %v211, %v219
    %v223 = vsel %vm199, %v220, 0
    %225 = vmatpush.msra.mxu0 0.0
    %226 = vmatpush.msra.mxu0 0.0
    %227 = vmatpush.msra.mxu0 0.0
    %228 = vmatpush.msra.mxu0 0.0
    %229 = vmatpush.msra.mxu0 0.0
    %230 = vmatpush.msra.mxu0 0.0
    %231 = vmatpush.msra.mxu0 0.0
    %232 = vmatpush.msra.mxu0 0.0
    %233 = vmatpush.msra.mxu0 0.0
    %234 = vmatpush.msra.mxu0 0.0
    %235 = vmatpush.msra.mxu0 0.0
    %236 = vmatpush.msra.mxu0 0.0
    %237 = vmatpush.msra.mxu0 0.0
    %238 = vmatpush.msra.mxu0 0.0
    %239 = vmatpush.msra.mxu0 0.0
    %240 = vmatpush.msra.mxu0 %v141
    %241 = vmatmul.f32.gmra.mxu0 %v223
    %v242 = vpop.f32.mrf.mxu0
    %v243 = vadd.f32 0.0, %v242
    %244 = vdwg.mxu0
    %v246 = vsel %vm199, %v221, 0
    %248 = vmatpush.msra.mxu0 0.0
    %249 = vmatpush.msra.mxu0 0.0
    %250 = vmatpush.msra.mxu0 0.0
    %251 = vmatpush.msra.mxu0 0.0
    %252 = vmatpush.msra.mxu0 0.0
    %253 = vmatpush.msra.mxu0 0.0
    %254 = vmatpush.msra.mxu0 0.0
    %255 = vmatpush.msra.mxu0 0.0
    %256 = vmatpush.msra.mxu0 0.0
    %257 = vmatpush.msra.mxu0 0.0
    %258 = vmatpush.msra.mxu0 0.0
    %259 = vmatpush.msra.mxu0 0.0
    %260 = vmatpush.msra.mxu0 0.0
    %261 = vmatpush.msra.mxu0 0.0
    %262 = vmatpush.msra.mxu0 0.0
    %263 = vmatpush.msra.mxu0 %v144
    %264 = vmatmul.f32.gmra.mxu0 %v246
    %v265 = vpop.f32.mrf.mxu0
    %v266 = vadd.f32 0.0, %v265
    %267 = vdwg.mxu0
    %v268 = vld [vmem:[%s5] sm:$0xff]
    %v269 = vld [vmem:[%s5 + $0x8] sm:$0x3]
    %270 = vrot.lane.b32.xlu0 %v95, 118
    %v271 = vpop.permute.xlu0 %270
    %272 = vrot.lane.b32.xlu0 %v118, 118
    %v273 = vpop.permute.xlu0 %272
    %v274 = vsel %vm146, %v271, 0
    %v276 = vsel %vm146, %v273, 0
    %278 = vmatpush.xpose.msra.mxu0 0.0
    %279 = vmatpush.xpose.msra.mxu0 0.0
    %280 = vmatpush.xpose.msra.mxu0 0.0
    %281 = vmatpush.xpose.msra.mxu0 0.0
    %282 = vmatpush.xpose.msra.mxu0 0.0
    %283 = vmatpush.xpose.msra.mxu0 0.0
    %284 = vmatpush.xpose.msra.mxu0 0.0
    %285 = vmatpush.xpose.msra.mxu0 0.0
    %286 = vmatpush.xpose.msra.mxu0 0.0
    %287 = vmatpush.xpose.msra.mxu0 0.0
    %288 = vmatpush.xpose.msra.mxu0 0.0
    %289 = vmatpush.xpose.msra.mxu0 0.0
    %290 = vmatpush.xpose.msra.mxu0 0.0
    %291 = vmatpush.xpose.msra.mxu0 0.0
    %292 = vmatpush.xpose.msra.mxu0 0.0
    %293 = vmatpush.xpose.msra.mxu0 %v276
    %294 = vmatmul.f32.gmra.mxu0 %v274
    %v295 = vpop.f32.mrf.mxu0
    %v296 = vadd.f32 %v45, %v295
    %297 = vdwg.mxu0
    %298 = vrot.lane.b32.xlu0 %v98, 118
    %v299 = vpop.permute.xlu0 %298
    %300 = vrot.lane.b32.xlu0 %v121, 118
    %v301 = vpop.permute.xlu0 %300
    %v302 = vsel %vm146, %v299, 0
    %v304 = vsel %vm146, %v301, 0
    %306 = vmatpush.xpose.msra.mxu0 0.0
    %307 = vmatpush.xpose.msra.mxu0 0.0
    %308 = vmatpush.xpose.msra.mxu0 0.0
    %309 = vmatpush.xpose.msra.mxu0 0.0
    %310 = vmatpush.xpose.msra.mxu0 0.0
    %311 = vmatpush.xpose.msra.mxu0 0.0
    %312 = vmatpush.xpose.msra.mxu0 0.0
    %313 = vmatpush.xpose.msra.mxu0 0.0
    %314 = vmatpush.xpose.msra.mxu0 0.0
    %315 = vmatpush.xpose.msra.mxu0 0.0
    %316 = vmatpush.xpose.msra.mxu0 0.0
    %317 = vmatpush.xpose.msra.mxu0 0.0
    %318 = vmatpush.xpose.msra.mxu0 0.0
    %319 = vmatpush.xpose.msra.mxu0 0.0
    %320 = vmatpush.xpose.msra.mxu0 0.0
    %321 = vmatpush.xpose.msra.mxu0 %v304
    %322 = vmatmul.f32.gmra.mxu0 %v302
    %v323 = vpop.f32.mrf.mxu0
    %v324 = vadd.f32 %v45, %v323
    %325 = vdwg.mxu0
    %v326 = vsel %vm199, %v296, -inf
    %327 = vmax.xlane.f32.xlu0 %v326
    %v328 = vpop.xlane.xlu0 %327
    %v329 = vsel %vm199, %v324, -inf
    %330 = vmax.xlane.f32.xlu0 %v329
    %v331 = vpop.xlane.xlu0 %330
    %v332 = vsub.f32 %v296, %v328
    %v333 = vsub.f32 %v324, %v331
    %v334 = vmul.f32 %v332, 1.442695
    %v335 = vpow.pop %v334
    %v336 = vmul.f32 %v333, 1.442695
    %v337 = vpow.pop %v336
    %v338 = vsel %vm199, %v335, 0.0
    %339 = vadd.xlane.f32.xlu0 %v338
    %v340 = vpop.xlane.xlu0 %339
    %v341 = vsel %vm199, %v337, 0.0
    %342 = vadd.xlane.f32.xlu0 %v341
    %v343 = vpop.xlane.xlu0 %342
    %v344 = vrcp.pop %v340
    %v345 = vrcp.pop %v343
    %v346 = vmul.f32 %v335, %v344
    %v347 = vmul.f32 %v337, %v345
    %349 = vrot.lane.b32.xlu0 %v141, 118
    %v350 = vpop.permute.xlu0 %349
    %v353 = vsel %vm199, %v346, 0
    %355 = vmatpush.msra.mxu0 0.0
    %356 = vmatpush.msra.mxu0 0.0
    %357 = vmatpush.msra.mxu0 0.0
    %358 = vmatpush.msra.mxu0 0.0
    %359 = vmatpush.msra.mxu0 0.0
    %360 = vmatpush.msra.mxu0 0.0
    %361 = vmatpush.msra.mxu0 0.0
    %362 = vmatpush.msra.mxu0 0.0
    %363 = vmatpush.msra.mxu0 0.0
    %364 = vmatpush.msra.mxu0 0.0
    %365 = vmatpush.msra.mxu0 0.0
    %366 = vmatpush.msra.mxu0 0.0
    %367 = vmatpush.msra.mxu0 0.0
    %368 = vmatpush.msra.mxu0 0.0
    %369 = vmatpush.msra.mxu0 0.0
    %370 = vmatpush.msra.mxu0 %v350
    %371 = vmatmul.f32.gmra.mxu0 %v353
    %v372 = vpop.f32.mrf.mxu0
    %v373 = vadd.f32 0.0, %v372
    %374 = vdwg.mxu0
    %376 = vrot.lane.b32.xlu0 %v144, 118
    %v377 = vpop.permute.xlu0 %376
    %v380 = vsel %vm199, %v347, 0
    %382 = vmatpush.msra.mxu0 0.0
    %383 = vmatpush.msra.mxu0 0.0
    %384 = vmatpush.msra.mxu0 0.0
    %385 = vmatpush.msra.mxu0 0.0
    %386 = vmatpush.msra.mxu0 0.0
    %387 = vmatpush.msra.mxu0 0.0
    %388 = vmatpush.msra.mxu0 0.0
    %389 = vmatpush.msra.mxu0 0.0
    %390 = vmatpush.msra.mxu0 0.0
    %391 = vmatpush.msra.mxu0 0.0
    %392 = vmatpush.msra.mxu0 0.0
    %393 = vmatpush.msra.mxu0 0.0
    %394 = vmatpush.msra.mxu0 0.0
    %395 = vmatpush.msra.mxu0 0.0
    %396 = vmatpush.msra.mxu0 0.0
    %397 = vmatpush.msra.mxu0 %v377
    %398 = vmatmul.f32.gmra.mxu0 %v380
    %v399 = vpop.f32.mrf.mxu0
    %v400 = vadd.f32 0.0, %v399
    %401 = vdwg.mxu0
    %s402 = scalar_lea.vmem %s5, 16
    %v403 = vld [vmem:[%s402] sm:$0xff]
    %v404 = vld [vmem:[%s402 + $0x8] sm:$0x3]
    %v406 = vsel %vm146, %v373, 0
    %v409 = vsel %vm146, %v400, 0
    %vm411 = vcmask 1041408
    %v413 = vsel %vm411, %v404, 0
    %415 = vmatpush.msra.mxu0 0.0
    %416 = vmatpush.msra.mxu0 0.0
    %417 = vmatpush.msra.mxu0 0.0
    %418 = vmatpush.msra.mxu0 0.0
    %419 = vmatpush.msra.mxu0 0.0
    %420 = vmatpush.msra.mxu0 0.0
    %421 = vmatpush.msra.mxu0 0.0
    %422 = vmatpush.msra.mxu0 0.0
    %423 = vmatpush.msra.mxu0 0.0
    %424 = vmatpush.msra.mxu0 0.0
    %425 = vmatpush.msra.mxu0 0.0
    %426 = vmatpush.msra.mxu0 0.0
    %427 = vmatpush.msra.mxu0 0.0
    %428 = vmatpush.msra.mxu0 0.0
    %429 = vmatpush.msra.mxu0 %v413
    %430 = vmatpush.msra.mxu0 %v403
    %431 = vmatmul.f32.gmra.mxu0 %v406
    %v432 = vpop.f32.mrf.mxu0
    %v433 = vadd.f32 0.0, %v432
    %434 = vmatmul.f32.gmra.mxu0 %v409
    %v435 = vpop.f32.mrf.mxu0
    %v436 = vadd.f32 0.0, %v435
    %437 = vdwg.mxu0
    %v439 = vsel %vm146, %v243, 0
    %v442 = vsel %vm146, %v266, 0
    %v445 = vsel %vm411, %v269, 0
    %447 = vmatpush.msra.mxu0 0.0
    %448 = vmatpush.msra.mxu0 0.0
    %449 = vmatpush.msra.mxu0 0.0
    %450 = vmatpush.msra.mxu0 0.0
    %451 = vmatpush.msra.mxu0 0.0
    %452 = vmatpush.msra.mxu0 0.0
    %453 = vmatpush.msra.mxu0 0.0
    %454 = vmatpush.msra.mxu0 0.0
    %455 = vmatpush.msra.mxu0 0.0
    %456 = vmatpush.msra.mxu0 0.0
    %457 = vmatpush.msra.mxu0 0.0
    %458 = vmatpush.msra.mxu0 0.0
    %459 = vmatpush.msra.mxu0 0.0
    %460 = vmatpush.msra.mxu0 0.0
    %461 = vmatpush.msra.mxu0 %v445
    %462 = vmatpush.msra.mxu0 %v268
    %463 = vmatmul.f32.gmra.mxu0 %v439
    %v464 = vpop.f32.mrf.mxu0
    %v465 = vadd.f32 %v433, %v464
    %466 = vmatmul.f32.gmra.mxu0 %v442
    %v467 = vpop.f32.mrf.mxu0
    %v468 = vadd.f32 %v436, %v467
    %469 = vdwg.mxu0
    %470 = vrot.lane.b32.xlu0 %v95, 108
    %v471 = vpop.permute.xlu0 %470
    %472 = vrot.lane.b32.xlu0 %v118, 108
    %v473 = vpop.permute.xlu0 %472
    %v474 = vsel %vm146, %v471, 0
    %v476 = vsel %vm146, %v473, 0
    %478 = vmatpush.xpose.msra.mxu0 0.0
    %479 = vmatpush.xpose.msra.mxu0 0.0
    %480 = vmatpush.xpose.msra.mxu0 0.0
    %481 = vmatpush.xpose.msra.mxu0 0.0
    %482 = vmatpush.xpose.msra.mxu0 0.0
    %483 = vmatpush.xpose.msra.mxu0 0.0
    %484 = vmatpush.xpose.msra.mxu0 0.0
    %485 = vmatpush.xpose.msra.mxu0 0.0
    %486 = vmatpush.xpose.msra.mxu0 0.0
    %487 = vmatpush.xpose.msra.mxu0 0.0
    %488 = vmatpush.xpose.msra.mxu0 0.0
    %489 = vmatpush.xpose.msra.mxu0 0.0
    %490 = vmatpush.xpose.msra.mxu0 0.0
    %491 = vmatpush.xpose.msra.mxu0 0.0
    %492 = vmatpush.xpose.msra.mxu0 0.0
    %493 = vmatpush.xpose.msra.mxu0 %v476
    %494 = vmatmul.f32.gmra.mxu0 %v474
    %v495 = vpop.f32.mrf.mxu0
    %v496 = vadd.f32 %v45, %v495
    %497 = vdwg.mxu0
    %498 = vrot.lane.b32.xlu0 %v98, 108
    %v499 = vpop.permute.xlu0 %498
    %500 = vrot.lane.b32.xlu0 %v121, 108
    %v501 = vpop.permute.xlu0 %500
    %v502 = vsel %vm146, %v499, 0
    %v504 = vsel %vm146, %v501, 0
    %506 = vmatpush.xpose.msra.mxu0 0.0
    %507 = vmatpush.xpose.msra.mxu0 0.0
    %508 = vmatpush.xpose.msra.mxu0 0.0
    %509 = vmatpush.xpose.msra.mxu0 0.0
    %510 = vmatpush.xpose.msra.mxu0 0.0
    %511 = vmatpush.xpose.msra.mxu0 0.0
    %512 = vmatpush.xpose.msra.mxu0 0.0
    %513 = vmatpush.xpose.msra.mxu0 0.0
    %514 = vmatpush.xpose.msra.mxu0 0.0
    %515 = vmatpush.xpose.msra.mxu0 0.0
    %516 = vmatpush.xpose.msra.mxu0 0.0
    %517 = vmatpush.xpose.msra.mxu0 0.0
    %518 = vmatpush.xpose.msra.mxu0 0.0
    %519 = vmatpush.xpose.msra.mxu0 0.0
    %520 = vmatpush.xpose.msra.mxu0 0.0
    %521 = vmatpush.xpose.msra.mxu0 %v504
    %522 = vmatmul.f32.gmra.mxu0 %v502
    %v523 = vpop.f32.mrf.mxu0
    %v524 = vadd.f32 %v45, %v523
    %525 = vdwg.mxu0
    %v526 = vsel %vm199, %v496, -inf
    %527 = vmax.xlane.f32.xlu0 %v526
    %v528 = vpop.xlane.xlu0 %527
    %v529 = vsel %vm199, %v524, -inf
    %530 = vmax.xlane.f32.xlu0 %v529
    %v531 = vpop.xlane.xlu0 %530
    %v532 = vsub.f32 %v496, %v528
    %v533 = vsub.f32 %v524, %v531
    %v534 = vmul.f32 %v532, 1.442695
    %v535 = vpow.pop %v534
    %v536 = vmul.f32 %v533, 1.442695
    %v537 = vpow.pop %v536
    %v538 = vsel %vm199, %v535, 0.0
    %539 = vadd.xlane.f32.xlu0 %v538
    %v540 = vpop.xlane.xlu0 %539
    %v541 = vsel %vm199, %v537, 0.0
    %542 = vadd.xlane.f32.xlu0 %v541
    %v543 = vpop.xlane.xlu0 %542
    %v544 = vrcp.pop %v540
    %v545 = vrcp.pop %v543
    %v546 = vmul.f32 %v535, %v544
    %v547 = vmul.f32 %v537, %v545
    %548 = vrot.lane.b32.xlu0 %v141, 108
    %v549 = vpop.permute.xlu0 %548
    %v552 = vsel %vm199, %v546, 0
    %554 = vmatpush.msra.mxu0 0.0
    %555 = vmatpush.msra.mxu0 0.0
    %556 = vmatpush.msra.mxu0 0.0
    %557 = vmatpush.msra.mxu0 0.0
    %558 = vmatpush.msra.mxu0 0.0
    %559 = vmatpush.msra.mxu0 0.0
    %560 = vmatpush.msra.mxu0 0.0
    %561 = vmatpush.msra.mxu0 0.0
    %562 = vmatpush.msra.mxu0 0.0
    %563 = vmatpush.msra.mxu0 0.0
    %564 = vmatpush.msra.mxu0 0.0
    %565 = vmatpush.msra.mxu0 0.0
    %566 = vmatpush.msra.mxu0 0.0
    %567 = vmatpush.msra.mxu0 0.0
    %568 = vmatpush.msra.mxu0 0.0
    %569 = vmatpush.msra.mxu0 %v549
    %570 = vmatmul.f32.gmra.mxu0 %v552
    %v571 = vpop.f32.mrf.mxu0
    %v572 = vadd.f32 0.0, %v571
    %573 = vdwg.mxu0
    %574 = vrot.lane.b32.xlu0 %v144, 108
    %v575 = vpop.permute.xlu0 %574
    %v578 = vsel %vm199, %v547, 0
    %580 = vmatpush.msra.mxu0 0.0
    %581 = vmatpush.msra.mxu0 0.0
    %582 = vmatpush.msra.mxu0 0.0
    %583 = vmatpush.msra.mxu0 0.0
    %584 = vmatpush.msra.mxu0 0.0
    %585 = vmatpush.msra.mxu0 0.0
    %586 = vmatpush.msra.mxu0 0.0
    %587 = vmatpush.msra.mxu0 0.0
    %588 = vmatpush.msra.mxu0 0.0
    %589 = vmatpush.msra.mxu0 0.0
    %590 = vmatpush.msra.mxu0 0.0
    %591 = vmatpush.msra.mxu0 0.0
    %592 = vmatpush.msra.mxu0 0.0
    %593 = vmatpush.msra.mxu0 0.0
    %594 = vmatpush.msra.mxu0 0.0
    %595 = vmatpush.msra.mxu0 %v575
    %596 = vmatmul.f32.gmra.mxu0 %v578
    %v597 = vpop.f32.mrf.mxu0
    %v598 = vadd.f32 0.0, %v597
    %599 = vdwg.mxu0
    %s600 = scalar_lea.vmem %s5, 32
    %v601 = vld [vmem:[%s600] sm:$0xff]
    %v602 = vld [vmem:[%s600 + $0x8] sm:$0x3]
    %v604 = vsel %vm146, %v572, 0
    %v607 = vsel %vm146, %v598, 0
    %v610 = vsel %vm411, %v602, 0
    %612 = vmatpush.msra.mxu0 0.0
    %613 = vmatpush.msra.mxu0 0.0
    %614 = vmatpush.msra.mxu0 0.0
    %615 = vmatpush.msra.mxu0 0.0
    %616 = vmatpush.msra.mxu0 0.0
    %617 = vmatpush.msra.mxu0 0.0
    %618 = vmatpush.msra.mxu0 0.0
    %619 = vmatpush.msra.mxu0 0.0
    %620 = vmatpush.msra.mxu0 0.0
    %621 = vmatpush.msra.mxu0 0.0
    %622 = vmatpush.msra.mxu0 0.0
    %623 = vmatpush.msra.mxu0 0.0
    %624 = vmatpush.msra.mxu0 0.0
    %625 = vmatpush.msra.mxu0 0.0
    %626 = vmatpush.msra.mxu0 %v610
    %627 = vmatpush.msra.mxu0 %v601
    %628 = vmatmul.f32.gmra.mxu0 %v604
    %v629 = vpop.f32.mrf.mxu0
    %v630 = vadd.f32 0.0, %v629
    %631 = vmatmul.f32.gmra.mxu0 %v607
    %v632 = vpop.f32.mrf.mxu0
    %v633 = vadd.f32 0.0, %v632
    %634 = vdwg.mxu0
    %v635 = vadd.f32 %v465, %v630
    %v636 = vadd.f32 %v468, %v633
    %637 = vrot.lane.b32.xlu0 %v95, 98
    %v638 = vpop.permute.xlu0 %637
    %639 = vrot.lane.b32.xlu0 %v118, 98
    %v640 = vpop.permute.xlu0 %639
    %v641 = vsel %vm146, %v638, 0
    %v643 = vsel %vm146, %v640, 0
    %645 = vmatpush.xpose.msra.mxu0 0.0
    %646 = vmatpush.xpose.msra.mxu0 0.0
    %647 = vmatpush.xpose.msra.mxu0 0.0
    %648 = vmatpush.xpose.msra.mxu0 0.0
    %649 = vmatpush.xpose.msra.mxu0 0.0
    %650 = vmatpush.xpose.msra.mxu0 0.0
    %651 = vmatpush.xpose.msra.mxu0 0.0
    %652 = vmatpush.xpose.msra.mxu0 0.0
    %653 = vmatpush.xpose.msra.mxu0 0.0
    %654 = vmatpush.xpose.msra.mxu0 0.0
    %655 = vmatpush.xpose.msra.mxu0 0.0
    %656 = vmatpush.xpose.msra.mxu0 0.0
    %657 = vmatpush.xpose.msra.mxu0 0.0
    %658 = vmatpush.xpose.msra.mxu0 0.0
    %659 = vmatpush.xpose.msra.mxu0 0.0
    %660 = vmatpush.xpose.msra.mxu0 %v643
    %661 = vmatmul.f32.gmra.mxu0 %v641
    %v662 = vpop.f32.mrf.mxu0
    %v663 = vadd.f32 %v45, %v662
    %664 = vdwg.mxu0
    %665 = vrot.lane.b32.xlu0 %v98, 98
    %v666 = vpop.permute.xlu0 %665
    %667 = vrot.lane.b32.xlu0 %v121, 98
    %v668 = vpop.permute.xlu0 %667
    %v669 = vsel %vm146, %v666, 0
    %v671 = vsel %vm146, %v668, 0
    %673 = vmatpush.xpose.msra.mxu0 0.0
    %674 = vmatpush.xpose.msra.mxu0 0.0
    %675 = vmatpush.xpose.msra.mxu0 0.0
    %676 = vmatpush.xpose.msra.mxu0 0.0
    %677 = vmatpush.xpose.msra.mxu0 0.0
    %678 = vmatpush.xpose.msra.mxu0 0.0
    %679 = vmatpush.xpose.msra.mxu0 0.0
    %680 = vmatpush.xpose.msra.mxu0 0.0
    %681 = vmatpush.xpose.msra.mxu0 0.0
    %682 = vmatpush.xpose.msra.mxu0 0.0
    %683 = vmatpush.xpose.msra.mxu0 0.0
    %684 = vmatpush.xpose.msra.mxu0 0.0
    %685 = vmatpush.xpose.msra.mxu0 0.0
    %686 = vmatpush.xpose.msra.mxu0 0.0
    %687 = vmatpush.xpose.msra.mxu0 0.0
    %688 = vmatpush.xpose.msra.mxu0 %v671
    %689 = vmatmul.f32.gmra.mxu0 %v669
    %v690 = vpop.f32.mrf.mxu0
    %v691 = vadd.f32 %v45, %v690
    %692 = vdwg.mxu0
    %v693 = vsel %vm199, %v663, -inf
    %694 = vmax.xlane.f32.xlu0 %v693
    %v695 = vpop.xlane.xlu0 %694
    %v696 = vsel %vm199, %v691, -inf
    %697 = vmax.xlane.f32.xlu0 %v696
    %v698 = vpop.xlane.xlu0 %697
    %v699 = vsub.f32 %v663, %v695
    %v700 = vsub.f32 %v691, %v698
    %v701 = vmul.f32 %v699, 1.442695
    %v702 = vpow.pop %v701
    %v703 = vmul.f32 %v700, 1.442695
    %v704 = vpow.pop %v703
    %v705 = vsel %vm199, %v702, 0.0
    %706 = vadd.xlane.f32.xlu0 %v705
    %v707 = vpop.xlane.xlu0 %706
    %v708 = vsel %vm199, %v704, 0.0
    %709 = vadd.xlane.f32.xlu0 %v708
    %v710 = vpop.xlane.xlu0 %709
    %v711 = vrcp.pop %v707
    %v712 = vrcp.pop %v710
    %v713 = vmul.f32 %v702, %v711
    %v714 = vmul.f32 %v704, %v712
    %715 = vrot.lane.b32.xlu0 %v141, 98
    %v716 = vpop.permute.xlu0 %715
    %v719 = vsel %vm199, %v713, 0
    %721 = vmatpush.msra.mxu0 0.0
    %722 = vmatpush.msra.mxu0 0.0
    %723 = vmatpush.msra.mxu0 0.0
    %724 = vmatpush.msra.mxu0 0.0
    %725 = vmatpush.msra.mxu0 0.0
    %726 = vmatpush.msra.mxu0 0.0
    %727 = vmatpush.msra.mxu0 0.0
    %728 = vmatpush.msra.mxu0 0.0
    %729 = vmatpush.msra.mxu0 0.0
    %730 = vmatpush.msra.mxu0 0.0
    %731 = vmatpush.msra.mxu0 0.0
    %732 = vmatpush.msra.mxu0 0.0
    %733 = vmatpush.msra.mxu0 0.0
    %734 = vmatpush.msra.mxu0 0.0
    %735 = vmatpush.msra.mxu0 0.0
    %736 = vmatpush.msra.mxu0 %v716
    %737 = vmatmul.f32.gmra.mxu0 %v719
    %v738 = vpop.f32.mrf.mxu0
    %v739 = vadd.f32 0.0, %v738
    %740 = vdwg.mxu0
    %741 = vrot.lane.b32.xlu0 %v144, 98
    %v742 = vpop.permute.xlu0 %741
    %v745 = vsel %vm199, %v714, 0
    %747 = vmatpush.msra.mxu0 0.0
    %748 = vmatpush.msra.mxu0 0.0
    %749 = vmatpush.msra.mxu0 0.0
    %750 = vmatpush.msra.mxu0 0.0
    %751 = vmatpush.msra.mxu0 0.0
    %752 = vmatpush.msra.mxu0 0.0
    %753 = vmatpush.msra.mxu0 0.0
    %754 = vmatpush.msra.mxu0 0.0
    %755 = vmatpush.msra.mxu0 0.0
    %756 = vmatpush.msra.mxu0 0.0
    %757 = vmatpush.msra.mxu0 0.0
    %758 = vmatpush.msra.mxu0 0.0
    %759 = vmatpush.msra.mxu0 0.0
    %760 = vmatpush.msra.mxu0 0.0
    %761 = vmatpush.msra.mxu0 0.0
    %762 = vmatpush.msra.mxu0 %v742
    %763 = vmatmul.f32.gmra.mxu0 %v745
    %v764 = vpop.f32.mrf.mxu0
    %v765 = vadd.f32 0.0, %v764
    %766 = vdwg.mxu0
    %s767 = scalar_lea.vmem %s5, 48
    %v768 = vld [vmem:[%s767] sm:$0xff]
    %v769 = vld [vmem:[%s767 + $0x8] sm:$0x3]
    %v771 = vsel %vm146, %v739, 0
    %v774 = vsel %vm146, %v765, 0
    %v777 = vsel %vm411, %v769, 0
    %779 = vmatpush.msra.mxu0 0.0
    %780 = vmatpush.msra.mxu0 0.0
    %781 = vmatpush.msra.mxu0 0.0
    %782 = vmatpush.msra.mxu0 0.0
    %783 = vmatpush.msra.mxu0 0.0
    %784 = vmatpush.msra.mxu0 0.0
    %785 = vmatpush.msra.mxu0 0.0
    %786 = vmatpush.msra.mxu0 0.0
    %787 = vmatpush.msra.mxu0 0.0
    %788 = vmatpush.msra.mxu0 0.0
    %789 = vmatpush.msra.mxu0 0.0
    %790 = vmatpush.msra.mxu0 0.0
    %791 = vmatpush.msra.mxu0 0.0
    %792 = vmatpush.msra.mxu0 0.0
    %793 = vmatpush.msra.mxu0 %v777
    %794 = vmatpush.msra.mxu0 %v768
    %795 = vmatmul.f32.gmra.mxu0 %v771
    %v796 = vpop.f32.mrf.mxu0
    %v797 = vadd.f32 0.0, %v796
    %798 = vmatmul.f32.gmra.mxu0 %v774
    %v799 = vpop.f32.mrf.mxu0
    %v800 = vadd.f32 0.0, %v799
    %801 = vdwg.mxu0
    %v802 = vadd.f32 %v635, %v797
    %v803 = vadd.f32 %v636, %v800
    %804 = vrot.lane.b32.xlu0 %v95, 88
    %v805 = vpop.permute.xlu0 %804
    %806 = vrot.lane.b32.xlu0 %v118, 88
    %v807 = vpop.permute.xlu0 %806
    %v808 = vsel %vm146, %v805, 0
    %v810 = vsel %vm146, %v807, 0
    %812 = vmatpush.xpose.msra.mxu0 0.0
    %813 = vmatpush.xpose.msra.mxu0 0.0
    %814 = vmatpush.xpose.msra.mxu0 0.0
    %815 = vmatpush.xpose.msra.mxu0 0.0
    %816 = vmatpush.xpose.msra.mxu0 0.0
    %817 = vmatpush.xpose.msra.mxu0 0.0
    %818 = vmatpush.xpose.msra.mxu0 0.0
    %819 = vmatpush.xpose.msra.mxu0 0.0
    %820 = vmatpush.xpose.msra.mxu0 0.0
    %821 = vmatpush.xpose.msra.mxu0 0.0
    %822 = vmatpush.xpose.msra.mxu0 0.0
    %823 = vmatpush.xpose.msra.mxu0 0.0
    %824 = vmatpush.xpose.msra.mxu0 0.0
    %825 = vmatpush.xpose.msra.mxu0 0.0
    %826 = vmatpush.xpose.msra.mxu0 0.0
    %827 = vmatpush.xpose.msra.mxu0 %v810
    %828 = vmatmul.f32.gmra.mxu0 %v808
    %v829 = vpop.f32.mrf.mxu0
    %v830 = vadd.f32 %v45, %v829
    %831 = vdwg.mxu0
    %832 = vrot.lane.b32.xlu0 %v98, 88
    %v833 = vpop.permute.xlu0 %832
    %834 = vrot.lane.b32.xlu0 %v121, 88
    %v835 = vpop.permute.xlu0 %834
    %v836 = vsel %vm146, %v833, 0
    %v838 = vsel %vm146, %v835, 0
    %840 = vmatpush.xpose.msra.mxu0 0.0
    %841 = vmatpush.xpose.msra.mxu0 0.0
    %842 = vmatpush.xpose.msra.mxu0 0.0
    %843 = vmatpush.xpose.msra.mxu0 0.0
    %844 = vmatpush.xpose.msra.mxu0 0.0
    %845 = vmatpush.xpose.msra.mxu0 0.0
    %846 = vmatpush.xpose.msra.mxu0 0.0
    %847 = vmatpush.xpose.msra.mxu0 0.0
    %848 = vmatpush.xpose.msra.mxu0 0.0
    %849 = vmatpush.xpose.msra.mxu0 0.0
    %850 = vmatpush.xpose.msra.mxu0 0.0
    %851 = vmatpush.xpose.msra.mxu0 0.0
    %852 = vmatpush.xpose.msra.mxu0 0.0
    %853 = vmatpush.xpose.msra.mxu0 0.0
    %854 = vmatpush.xpose.msra.mxu0 0.0
    %855 = vmatpush.xpose.msra.mxu0 %v838
    %856 = vmatmul.f32.gmra.mxu0 %v836
    %v857 = vpop.f32.mrf.mxu0
    %v858 = vadd.f32 %v45, %v857
    %859 = vdwg.mxu0
    %v860 = vsel %vm199, %v830, -inf
    %861 = vmax.xlane.f32.xlu0 %v860
    %v862 = vpop.xlane.xlu0 %861
    %v863 = vsel %vm199, %v858, -inf
    %864 = vmax.xlane.f32.xlu0 %v863
    %v865 = vpop.xlane.xlu0 %864
    %v866 = vsub.f32 %v830, %v862
    %v867 = vsub.f32 %v858, %v865
    %v868 = vmul.f32 %v866, 1.442695
    %v869 = vpow.pop %v868
    %v870 = vmul.f32 %v867, 1.442695
    %v871 = vpow.pop %v870
    %v872 = vsel %vm199, %v869, 0.0
    %873 = vadd.xlane.f32.xlu0 %v872
    %v874 = vpop.xlane.xlu0 %873
    %v875 = vsel %vm199, %v871, 0.0
    %876 = vadd.xlane.f32.xlu0 %v875
    %v877 = vpop.xlane.xlu0 %876
    %v878 = vrcp.pop %v874
    %v879 = vrcp.pop %v877
    %v880 = vmul.f32 %v869, %v878
    %v881 = vmul.f32 %v871, %v879
    %882 = vrot.lane.b32.xlu0 %v141, 88
    %v883 = vpop.permute.xlu0 %882
    %v886 = vsel %vm199, %v880, 0
    %888 = vmatpush.msra.mxu0 0.0
    %889 = vmatpush.msra.mxu0 0.0
    %890 = vmatpush.msra.mxu0 0.0
    %891 = vmatpush.msra.mxu0 0.0
    %892 = vmatpush.msra.mxu0 0.0
    %893 = vmatpush.msra.mxu0 0.0
    %894 = vmatpush.msra.mxu0 0.0
    %895 = vmatpush.msra.mxu0 0.0
    %896 = vmatpush.msra.mxu0 0.0
    %897 = vmatpush.msra.mxu0 0.0
    %898 = vmatpush.msra.mxu0 0.0
    %899 = vmatpush.msra.mxu0 0.0
    %900 = vmatpush.msra.mxu0 0.0
    %901 = vmatpush.msra.mxu0 0.0
    %902 = vmatpush.msra.mxu0 0.0
    %903 = vmatpush.msra.mxu0 %v883
    %904 = vmatmul.f32.gmra.mxu0 %v886
    %v905 = vpop.f32.mrf.mxu0
    %v906 = vadd.f32 0.0, %v905
    %907 = vdwg.mxu0
    %908 = vrot.lane.b32.xlu0 %v144, 88
    %v909 = vpop.permute.xlu0 %908
    %v912 = vsel %vm199, %v881, 0
    %914 = vmatpush.msra.mxu0 0.0
    %915 = vmatpush.msra.mxu0 0.0
    %916 = vmatpush.msra.mxu0 0.0
    %917 = vmatpush.msra.mxu0 0.0
    %918 = vmatpush.msra.mxu0 0.0
    %919 = vmatpush.msra.mxu0 0.0
    %920 = vmatpush.msra.mxu0 0.0
    %921 = vmatpush.msra.mxu0 0.0
    %922 = vmatpush.msra.mxu0 0.0
    %923 = vmatpush.msra.mxu0 0.0
    %924 = vmatpush.msra.mxu0 0.0
    %925 = vmatpush.msra.mxu0 0.0
    %926 = vmatpush.msra.mxu0 0.0
    %927 = vmatpush.msra.mxu0 0.0
    %928 = vmatpush.msra.mxu0 0.0
    %929 = vmatpush.msra.mxu0 %v909
    %930 = vmatmul.f32.gmra.mxu0 %v912
    %v931 = vpop.f32.mrf.mxu0
    %v932 = vadd.f32 0.0, %v931
    %933 = vdwg.mxu0
    %s934 = scalar_lea.vmem %s5, 64
    %v935 = vld [vmem:[%s934] sm:$0xff]
    %v936 = vld [vmem:[%s934 + $0x8] sm:$0x3]
    %v938 = vsel %vm146, %v906, 0
    %v941 = vsel %vm146, %v932, 0
    %v944 = vsel %vm411, %v936, 0
    %946 = vmatpush.msra.mxu0 0.0
    %947 = vmatpush.msra.mxu0 0.0
    %948 = vmatpush.msra.mxu0 0.0
    %949 = vmatpush.msra.mxu0 0.0
    %950 = vmatpush.msra.mxu0 0.0
    %951 = vmatpush.msra.mxu0 0.0
    %952 = vmatpush.msra.mxu0 0.0
    %953 = vmatpush.msra.mxu0 0.0
    %954 = vmatpush.msra.mxu0 0.0
    %955 = vmatpush.msra.mxu0 0.0
    %956 = vmatpush.msra.mxu0 0.0
    %957 = vmatpush.msra.mxu0 0.0
    %958 = vmatpush.msra.mxu0 0.0
    %959 = vmatpush.msra.mxu0 0.0
    %960 = vmatpush.msra.mxu0 %v944
    %961 = vmatpush.msra.mxu0 %v935
    %962 = vmatmul.f32.gmra.mxu0 %v938
    %v963 = vpop.f32.mrf.mxu0
    %v964 = vadd.f32 0.0, %v963
    %965 = vmatmul.f32.gmra.mxu0 %v941
    %v966 = vpop.f32.mrf.mxu0
    %v967 = vadd.f32 0.0, %v966
    %968 = vdwg.mxu0
    %v969 = vadd.f32 %v802, %v964
    %v970 = vadd.f32 %v803, %v967
    %971 = vrot.lane.b32.xlu0 %v95, 78
    %v972 = vpop.permute.xlu0 %971
    %973 = vrot.lane.b32.xlu0 %v118, 78
    %v974 = vpop.permute.xlu0 %973
    %v975 = vsel %vm146, %v972, 0
    %v977 = vsel %vm146, %v974, 0
    %979 = vmatpush.xpose.msra.mxu0 0.0
    %980 = vmatpush.xpose.msra.mxu0 0.0
    %981 = vmatpush.xpose.msra.mxu0 0.0
    %982 = vmatpush.xpose.msra.mxu0 0.0
    %983 = vmatpush.xpose.msra.mxu0 0.0
    %984 = vmatpush.xpose.msra.mxu0 0.0
    %985 = vmatpush.xpose.msra.mxu0 0.0
    %986 = vmatpush.xpose.msra.mxu0 0.0
    %987 = vmatpush.xpose.msra.mxu0 0.0
    %988 = vmatpush.xpose.msra.mxu0 0.0
    %989 = vmatpush.xpose.msra.mxu0 0.0
    %990 = vmatpush.xpose.msra.mxu0 0.0
    %991 = vmatpush.xpose.msra.mxu0 0.0
    %992 = vmatpush.xpose.msra.mxu0 0.0
    %993 = vmatpush.xpose.msra.mxu0 0.0
    %994 = vmatpush.xpose.msra.mxu0 %v977
    %995 = vmatmul.f32.gmra.mxu0 %v975
    %v996 = vpop.f32.mrf.mxu0
    %v997 = vadd.f32 %v45, %v996
    %998 = vdwg.mxu0
    %999 = vrot.lane.b32.xlu0 %v98, 78
    %v1000 = vpop.permute.xlu0 %999
    %1001 = vrot.lane.b32.xlu0 %v121, 78
    %v1002 = vpop.permute.xlu0 %1001
    %v1003 = vsel %vm146, %v1000, 0
    %v1005 = vsel %vm146, %v1002, 0
    %1007 = vmatpush.xpose.msra.mxu0 0.0
    %1008 = vmatpush.xpose.msra.mxu0 0.0
    %1009 = vmatpush.xpose.msra.mxu0 0.0
    %1010 = vmatpush.xpose.msra.mxu0 0.0
    %1011 = vmatpush.xpose.msra.mxu0 0.0
    %1012 = vmatpush.xpose.msra.mxu0 0.0
    %1013 = vmatpush.xpose.msra.mxu0 0.0
    %1014 = vmatpush.xpose.msra.mxu0 0.0
    %1015 = vmatpush.xpose.msra.mxu0 0.0
    %1016 = vmatpush.xpose.msra.mxu0 0.0
    %1017 = vmatpush.xpose.msra.mxu0 0.0
    %1018 = vmatpush.xpose.msra.mxu0 0.0
    %1019 = vmatpush.xpose.msra.mxu0 0.0
    %1020 = vmatpush.xpose.msra.mxu0 0.0
    %1021 = vmatpush.xpose.msra.mxu0 0.0
    %1022 = vmatpush.xpose.msra.mxu0 %v1005
    %1023 = vmatmul.f32.gmra.mxu0 %v1003
    %v1024 = vpop.f32.mrf.mxu0
    %v1025 = vadd.f32 %v45, %v1024
    %1026 = vdwg.mxu0
    %v1027 = vsel %vm199, %v997, -inf
    %1028 = vmax.xlane.f32.xlu0 %v1027
    %v1029 = vpop.xlane.xlu0 %1028
    %v1030 = vsel %vm199, %v1025, -inf
    %1031 = vmax.xlane.f32.xlu0 %v1030
    %v1032 = vpop.xlane.xlu0 %1031
    %v1033 = vsub.f32 %v997, %v1029
    %v1034 = vsub.f32 %v1025, %v1032
    %v1035 = vmul.f32 %v1033, 1.442695
    %v1036 = vpow.pop %v1035
    %v1037 = vmul.f32 %v1034, 1.442695
    %v1038 = vpow.pop %v1037
    %v1039 = vsel %vm199, %v1036, 0.0
    %1040 = vadd.xlane.f32.xlu0 %v1039
    %v1041 = vpop.xlane.xlu0 %1040
    %v1042 = vsel %vm199, %v1038, 0.0
    %1043 = vadd.xlane.f32.xlu0 %v1042
    %v1044 = vpop.xlane.xlu0 %1043
    %v1045 = vrcp.pop %v1041
    %v1046 = vrcp.pop %v1044
    %v1047 = vmul.f32 %v1036, %v1045
    %v1048 = vmul.f32 %v1038, %v1046
    %1049 = vrot.lane.b32.xlu0 %v141, 78
    %v1050 = vpop.permute.xlu0 %1049
    %v1053 = vsel %vm199, %v1047, 0
    %1055 = vmatpush.msra.mxu0 0.0
    %1056 = vmatpush.msra.mxu0 0.0
    %1057 = vmatpush.msra.mxu0 0.0
    %1058 = vmatpush.msra.mxu0 0.0
    %1059 = vmatpush.msra.mxu0 0.0
    %1060 = vmatpush.msra.mxu0 0.0
    %1061 = vmatpush.msra.mxu0 0.0
    %1062 = vmatpush.msra.mxu0 0.0
    %1063 = vmatpush.msra.mxu0 0.0
    %1064 = vmatpush.msra.mxu0 0.0
    %1065 = vmatpush.msra.mxu0 0.0
    %1066 = vmatpush.msra.mxu0 0.0
    %1067 = vmatpush.msra.mxu0 0.0
    %1068 = vmatpush.msra.mxu0 0.0
    %1069 = vmatpush.msra.mxu0 0.0
    %1070 = vmatpush.msra.mxu0 %v1050
    %1071 = vmatmul.f32.gmra.mxu0 %v1053
    %v1072 = vpop.f32.mrf.mxu0
    %v1073 = vadd.f32 0.0, %v1072
    %1074 = vdwg.mxu0
    %1075 = vrot.lane.b32.xlu0 %v144, 78
    %v1076 = vpop.permute.xlu0 %1075
    %v1079 = vsel %vm199, %v1048, 0
    %1081 = vmatpush.msra.mxu0 0.0
    %1082 = vmatpush.msra.mxu0 0.0
    %1083 = vmatpush.msra.mxu0 0.0
    %1084 = vmatpush.msra.mxu0 0.0
    %1085 = vmatpush.msra.mxu0 0.0
    %1086 = vmatpush.msra.mxu0 0.0
    %1087 = vmatpush.msra.mxu0 0.0
    %1088 = vmatpush.msra.mxu0 0.0
    %1089 = vmatpush.msra.mxu0 0.0
    %1090 = vmatpush.msra.mxu0 0.0
    %1091 = vmatpush.msra.mxu0 0.0
    %1092 = vmatpush.msra.mxu0 0.0
    %1093 = vmatpush.msra.mxu0 0.0
    %1094 = vmatpush.msra.mxu0 0.0
    %1095 = vmatpush.msra.mxu0 0.0
    %1096 = vmatpush.msra.mxu0 %v1076
    %1097 = vmatmul.f32.gmra.mxu0 %v1079
    %v1098 = vpop.f32.mrf.mxu0
    %v1099 = vadd.f32 0.0, %v1098
    %1100 = vdwg.mxu0
    %s1101 = scalar_lea.vmem %s5, 80
    %v1102 = vld [vmem:[%s1101] sm:$0xff]
    %v1103 = vld [vmem:[%s1101 + $0x8] sm:$0x3]
    %v1105 = vsel %vm146, %v1073, 0
    %v1108 = vsel %vm146, %v1099, 0
    %v1111 = vsel %vm411, %v1103, 0
    %1113 = vmatpush.msra.mxu0 0.0
    %1114 = vmatpush.msra.mxu0 0.0
    %1115 = vmatpush.msra.mxu0 0.0
    %1116 = vmatpush.msra.mxu0 0.0
    %1117 = vmatpush.msra.mxu0 0.0
    %1118 = vmatpush.msra.mxu0 0.0
    %1119 = vmatpush.msra.mxu0 0.0
    %1120 = vmatpush.msra.mxu0 0.0
    %1121 = vmatpush.msra.mxu0 0.0
    %1122 = vmatpush.msra.mxu0 0.0
    %1123 = vmatpush.msra.mxu0 0.0
    %1124 = vmatpush.msra.mxu0 0.0
    %1125 = vmatpush.msra.mxu0 0.0
    %1126 = vmatpush.msra.mxu0 0.0
    %1127 = vmatpush.msra.mxu0 %v1111
    %1128 = vmatpush.msra.mxu0 %v1102
    %1129 = vmatmul.f32.gmra.mxu0 %v1105
    %v1130 = vpop.f32.mrf.mxu0
    %v1131 = vadd.f32 0.0, %v1130
    %1132 = vmatmul.f32.gmra.mxu0 %v1108
    %v1133 = vpop.f32.mrf.mxu0
    %v1134 = vadd.f32 0.0, %v1133
    %1135 = vdwg.mxu0
    %v1136 = vadd.f32 %v969, %v1131
    %v1137 = vadd.f32 %v970, %v1134
    %v1138 = vld [vmem:[%s6] sm:$0x1]
    %v1140 = vperm.slane %v1138, 0
    %v1142 = vadd.f32 %v1136, %v1140
    %v1143 = vadd.f32 %v1137, %v1140
    %1144 = vst.msk [vmem:[#allocation5] sm:$0xff] %vm70, %v1142
    %1145 = vst.msk [vmem:[#allocation5 + $0x8] sm:$0xff] %vm70, %v1143
    // Predicated region
    $region34: #{tpu_custom_call.1} parent=1 // pred_check
      _
    $region35: #{tpu_custom_call.1} parent=1 // pred_check_branch
      %1147 = sbr.rel (0) target = $region37
    $region36: #{tpu_custom_call.1} parent=1 // pred_region
      %1149 = vsyncadd [#allocation4], 0
      %s1150 = sshll.u32 [#allocation5], 4
      %s1151 = int_to_ptr.vmem [resolvable:$true] %s1150
      %s1152 = sshll.u32 %s7, 4
      %s1153 = int_to_ptr.hbm [resolvable:$true] %s1152
      %1158 = dma.vmem_to_hbm [thread:$0]  %s1151, 256, %s1153, [#allocation4], 128, 128, 8
    $region37: #{tpu_custom_call.1} parent=1 // pred_fallthru
      _
    // Predicated region
    $region38: #{tpu_custom_call.1} parent=1 // pred_check
      _
    $region39: #{tpu_custom_call.1} parent=1 // pred_check_branch
      %1160 = sbr.rel (0) target = $region41
    $region40: #{tpu_custom_call.1} parent=1 // pred_region
      %1162 = dma.done [#allocation4], 256
    $region41: #{tpu_custom_call.1} parent=1 // pred_fallthru
      _
    %1163 = vsyncpa [#allocation3], 1
    %1164 = vsyncpa [#allocation4], 1

</llo_original>
